<compile_context>
chip_gen: v7x
topology: tpu7x:2x2x1
jax: 0.10.0
libtpu: 0.0.40
codegen_flags: <defaults>
</compile_context>

<pallas_src>
import functools

import jax
import jax.numpy as jnp
from jax.experimental import pallas as pl
from jax.experimental.pallas import tpu as pltpu


def _log_sigmoid(x):
    # numerically stable: log(sigmoid(x)) = min(x, 0) - log1p(exp(-|x|))
    return jnp.minimum(x, 0.0) - jnp.log1p(jnp.exp(-jnp.abs(x)))


# ---------------------------------------------------------------------------
# Path 1: vocab tables resident in VMEM, indices streamed, in-kernel gather.
# ---------------------------------------------------------------------------
def _skipgram_resident_kernel(ctx_ref, tgt_ref, neg_ref, w1_ref, w2_ref,
                              out_ref, *, batch, tile_b, num_neg):
    """One grid step = tile_b batch rows.

    ctx_ref: (TB, 1) int32     context word ids
    tgt_ref: (TB, 1) int32     target word ids
    neg_ref: (K, TB, 1) int32  negative-sample ids
    w1_ref:  (V, D)            input-embedding table (resident across grid)
    w2_ref:  (V, D)            output-embedding table (resident across grid)
    out_ref: (1, TB)           lane-dense per-row loss partials (masked)
    """
    vocab = w1_ref.shape[0]
    iota_v = jax.lax.broadcasted_iota(jnp.int32, (tile_b, vocab), 1)

    # gather emb_u = w1[ctx] via one-hot @ table on the MXU
    oh_u = (ctx_ref[...] == iota_v).astype(w1_ref.dtype)               # (TB, V)
    emb_u = jnp.dot(oh_u, w1_ref[...],
                    preferred_element_type=jnp.float32)                # (TB, D)

    # score of each row's emb_u against EVERY w2 row: s_all[b, v] = emb_u[b]·w2[v]
    s_all = jax.lax.dot_general(
        emb_u, w2_ref[...].astype(jnp.float32),
        dimension_numbers=(((1,), (1,)), ((), ())),
        preferred_element_type=jnp.float32)                            # (TB, V)

    # positive score: pick s_all[b, tgt[b]] with a one-hot mask
    pos_dot = jnp.sum(jnp.where(tgt_ref[...] == iota_v, s_all, 0.0), axis=-1)
    loss = _log_sigmoid(pos_dot)                                       # (TB,)

    # negative scores: pick s_all[b, neg[b, k]] per sample and accumulate
    def body(k, acc):
        mask = neg_ref[k] == iota_v                                    # (TB, V)
        neg_dot = jnp.sum(jnp.where(mask, s_all, 0.0), axis=-1)        # (TB,)
        return acc + _log_sigmoid(-neg_dot)

    loss = loss + jax.lax.fori_loop(0, num_neg, body,
                                    jnp.zeros((tile_b,), jnp.float32),
                                    unroll=num_neg <= 8)

    # mask batch-padding rows; write lane-dense partials
    i = pl.program_id(0)
    g = jax.lax.broadcasted_iota(jnp.int32, (1, tile_b), 1) + i * tile_b
    out_ref[...] = jnp.where(g < batch, loss.reshape(1, tile_b), 0.0)


# ---------------------------------------------------------------------------
# Path 2: wrapper-side gather, narrow-dtype streaming of dense embedding tiles.
# ---------------------------------------------------------------------------
def _skipgram_stream_kernel(u_ref, v_ref, neg_ref, out_ref,
                            *, batch, tile_b, num_neg):
    """One grid step = tile_b batch rows (pre-gathered embeddings streamed).

    u_ref:   (TB, D)     w1[context_words[tile]]   (bf16 or f32)
    v_ref:   (TB, D)     w2[targets[tile]]
    neg_ref: (K, TB, D)  w2[negative_samples[tile]] (K leading: no sublane pad)
    out_ref: (1, TB)     lane-dense per-row loss partials (masked)
    """
    u = u_ref[...].astype(jnp.float32)                                 # (TB, D)
    v = v_ref[...].astype(jnp.float32)                                 # (TB, D)

    pos = _log_sigmoid(jnp.sum(u * v, axis=-1))                        # (TB,)

    def body(k, acc):
        nk = neg_ref[k].astype(jnp.float32)                            # (TB, D)
        neg_dot = jnp.sum(nk * u, axis=-1)                             # (TB,)
        return acc + _log_sigmoid(-neg_dot)

    negs = jax.lax.fori_loop(0, num_neg, body,
                             jnp.zeros((tile_b,), jnp.float32),
                             unroll=num_neg <= 8)

    i = pl.program_id(0)
    g = jax.lax.broadcasted_iota(jnp.int32, (1, tile_b), 1) + i * tile_b
    out_ref[...] = jnp.where(g < batch, (pos + negs).reshape(1, tile_b), 0.0)


# ---------------------------------------------------------------------------
# Wrapper
# ---------------------------------------------------------------------------
def _auto_tile_b(batch, bytes_per_row, *, target_bytes=4 << 20, cap=1024):
    """Batch-tile: multiple of 128, big enough to amortize ~0.35us/step, small
    enough to fit VMEM and (when the batch allows) leave >=2 grid steps so the
    'parallel' axis shards across v7x's two TensorCores."""
    b_ru = pl.cdiv(batch, 128) * 128
    t = (target_bytes // max(1, bytes_per_row)) // 128 * 128
    t = max(128, min(t, cap, b_ru))
    if b_ru >= 256:
        t = min(t, max(128, (b_ru // 2) // 128 * 128))
    return int(t)


def _vmem_limit(est_bytes):
    # explicit scoped-VMEM request: above v5e's 16 MiB default when needed,
    # but capped safely below v7x's 64 MiB physical VMEM.
    return int(min(56 << 20, est_bytes + (16 << 20)))


def skipgram_forward(w1, w2, context_words, targets, negative_samples, *,
                     tile_b=None, use_resident_table=None,
                     stream_dtype=jnp.bfloat16):
    """Pallas implementation of SkipGramNet.forward. Returns the scalar loss."""
    V, D = w1.shape
    (B,) = context_words.shape
    _, K = negative_samples.shape
    tbl_itemsize = jnp.dtype(w1.dtype).itemsize

    if use_resident_table is None:
        # keep both tables VMEM-resident only when they are comfortably small
        use_resident_table = (V <= 2048) and (2 * V * D * tbl_itemsize <= (8 << 20))

    if use_resident_table:
        if tile_b is None:
            # per-row f32 temps ~ one-hots/score-matrix (V lanes) + emb_u (D lanes)
            tile_b = _auto_tile_b(B, (4 * V + 4 * D) * 4)
        n_tiles = pl.cdiv(B, tile_b)
        b_pad = n_tiles * tile_b

        # pad batch with index 0 (valid row); padded rows are masked in-kernel
        ctx = jnp.pad(context_words.astype(jnp.int32), (0, b_pad - B)).reshape(b_pad, 1)
        tgt = jnp.pad(targets.astype(jnp.int32), (0, b_pad - B)).reshape(b_pad, 1)
        neg = jnp.pad(negative_samples.astype(jnp.int32), ((0, b_pad - B), (0, 0)))
        neg = neg.T.reshape(K, b_pad, 1)           # K leading, row index on sublanes

        kernel = functools.partial(_skipgram_resident_kernel,
                                   batch=B, tile_b=tile_b, num_neg=K)

        est = (2 * 2 * V * D * tbl_itemsize          # both tables (+ headroom)
               + 2 * (2 + K) * tile_b * 4            # double-buffered index blocks
               + (4 * V + 4 * D) * tile_b * 4        # f32 temps
               + 2 * tile_b * 4)                     # output
        partial = pl.pallas_call(
            kernel,
            out_shape=jax.ShapeDtypeStruct((1, b_pad), jnp.float32),
            grid_spec=pltpu.PrefetchScalarGridSpec(
                num_scalar_prefetch=0,
                grid=(n_tiles,),
                in_specs=[
                    pl.BlockSpec((tile_b, 1), lambda i: (i, 0)),
                    pl.BlockSpec((tile_b, 1), lambda i: (i, 0)),
                    pl.BlockSpec((K, tile_b, 1), lambda i: (0, i, 0)),
                    pl.BlockSpec((V, D), lambda i: (0, 0)),   # w1 resident across grid
                    pl.BlockSpec((V, D), lambda i: (0, 0)),   # w2 resident across grid
                ],
                out_specs=pl.BlockSpec((1, tile_b), lambda i: (0, i)),
            ),
            compiler_params=pltpu.CompilerParams(
                dimension_semantics=("parallel",),
                vmem_limit_bytes=_vmem_limit(est)),
        )(ctx, tgt, neg, w1, w2)
    else:
        # TODO(synk): for huge vocabularies the gather itself stays an XLA op.
        stream_itemsize = jnp.dtype(stream_dtype).itemsize
        if tile_b is None:
            tile_b = _auto_tile_b(B, K * D * stream_itemsize)
        n_tiles = pl.cdiv(B, tile_b)
        b_pad = n_tiles * tile_b

        ctx = jnp.pad(context_words.astype(jnp.int32), (0, b_pad - B))
        tgt = jnp.pad(targets.astype(jnp.int32), (0, b_pad - B))
        neg = jnp.pad(negative_samples.astype(jnp.int32), ((0, b_pad - B), (0, 0)))

        # wrapper-side gather; stream narrow dtype, un-padded D, K leading so the
        # tiled dims of the negatives block are (tile_b, D) — no K<8 sublane pad.
        emb_u = jnp.take(w1, ctx, axis=0).astype(stream_dtype)             # (b_pad, D)
        emb_v = jnp.take(w2, tgt, axis=0).astype(stream_dtype)             # (b_pad, D)
        emb_n = jnp.take(w2, neg.T.reshape(-1), axis=0).astype(stream_dtype)
        emb_n = emb_n.reshape(K, b_pad, D)                                  # (K, b_pad, D)

        kernel = functools.partial(_skipgram_stream_kernel,
                                   batch=B, tile_b=tile_b, num_neg=K)

        est = (2 * (2 + K) * tile_b * D * stream_itemsize   # double-buffered inputs
               + 4 * tile_b * D * 4                         # f32 temps
               + 2 * tile_b * 4)                            # output
        partial = pl.pallas_call(
            kernel,
            out_shape=jax.ShapeDtypeStruct((1, b_pad), jnp.float32),
            grid_spec=pltpu.PrefetchScalarGridSpec(
                num_scalar_prefetch=0,
                grid=(n_tiles,),
                in_specs=[
                    pl.BlockSpec((tile_b, D), lambda i: (i, 0)),
                    pl.BlockSpec((tile_b, D), lambda i: (i, 0)),
                    pl.BlockSpec((K, tile_b, D), lambda i: (0, i, 0)),
                ],
                out_specs=pl.BlockSpec((1, tile_b), lambda i: (0, i)),
            ),
            compiler_params=pltpu.CompilerParams(
                dimension_semantics=("parallel",),
                vmem_limit_bytes=_vmem_limit(est)),
        )(emb_u, emb_v, emb_n)

    # final reduction + negation of the lane-dense partials (padded rows are 0)
    return -jnp.sum(partial)


def skipgram_reference(w1, w2, context_words, targets, negative_samples):
    """Pure-JAX reference mirroring the PyTorch forward."""
    emb_u = w1[context_words]                                   # (B, D)
    emb_v = w2[targets]                                         # (B, D)
    emb_neg = w2[negative_samples]                              # (B, K, D)
    pos = _log_sigmoid(jnp.sum(emb_u * emb_v, axis=1))          # (B,)
    neg = jnp.einsum("bkd,bd->bk", emb_neg, emb_u)              # (B, K)
    neg = _log_sigmoid(-neg)
    return -(jnp.sum(pos) + jnp.sum(neg))


if __name__ == "__main__":
    vocab_size = 64
    out_dimension = 200      # module default; D is streamed un-padded

    key = jax.random.PRNGKey(0)
    k_w1, k_w2 = jax.random.split(key, 2)

    # init_emb(): w1 ~ U(-0.5/D, 0.5/D), w2 = 0; also test a non-trivial w2
    initrange = 0.5 / out_dimension
    w1 = jax.random.uniform(k_w1, (vocab_size, out_dimension),
                            jnp.float32, -initrange, initrange)
    w2_zero = jnp.zeros((vocab_size, out_dimension), jnp.float32)
    w2_rand = jax.random.uniform(k_w2, (vocab_size, out_dimension),
                                 jnp.float32, -initrange, initrange)

    # (B, K) configs: single-tile small batch and a multi-tile ragged batch
    for (B, K) in ((8, 4), (300, 5)):
        kb = jax.random.fold_in(key, B)
        kc, kt, kn = jax.random.split(kb, 3)
        ctx = jax.random.randint(kc, (B,), 0, vocab_size, dtype=jnp.int32)
        tgt = jax.random.randint(kt, (B,), 0, vocab_size, dtype=jnp.int32)
        neg = jax.random.randint(kn, (B, K), 0, vocab_size, dtype=jnp.int32)

        for w2 in (w2_zero, w2_rand):
            ref = skipgram_reference(w1, w2, ctx, tgt, neg)

            # 1) VMEM-resident table path (default for this small vocab)
            out_res = jax.block_until_ready(
                skipgram_forward(w1, w2, ctx, tgt, neg, use_resident_table=True))
            assert jnp.allclose(out_res, ref, rtol=1e-4, atol=1e-4), (out_res, ref)

            # 2) streaming path, f32 (exercises the large-vocab fallback exactly)
            out_f32 = jax.block_until_ready(
                skipgram_forward(w1, w2, ctx, tgt, neg,
                                 use_resident_table=False,
                                 stream_dtype=jnp.float32))
            assert jnp.allclose(out_f32, ref, rtol=1e-4, atol=1e-4), (out_f32, ref)

            # 3) streaming path, bf16 inputs (default fallback; small drift expected)
            out_bf16 = jax.block_until_ready(
                skipgram_forward(w1, w2, ctx, tgt, neg, use_resident_table=False))
            assert jnp.allclose(out_bf16, ref, rtol=2e-2, atol=2e-2), (out_bf16, ref)

    print("KERNEL_OK")
</pallas_src>

<mosaic_0001>
module attributes {stable_mosaic.version = 11 : i64} {
  func.func @_skipgram_resident_kernel(%arg0: i32, %arg1: memref<128x1xi32, #tpu.memory_space<vmem>>, %arg2: memref<128x1xi32, #tpu.memory_space<vmem>>, %arg3: memref<4x128x1xi32, #tpu.memory_space<vmem>>, %arg4: memref<64x200xf32, #tpu.memory_space<vmem>>, %arg5: memref<64x200xf32, #tpu.memory_space<vmem>>, %arg6: memref<1x128xf32, #tpu.memory_space<vmem>>) attributes {dimension_semantics = [#tpu.dimension_semantics<parallel>], iteration_bounds = array<i64: 1>, scalar_prefetch = 0 : i64, scratch_operands = 0 : i64, tpu.core_type = #tpu.core_type<tc>, window_params = [{transform_indices = @transform_0, window_bounds = array<i64: 128, 1>}, {transform_indices = @transform_1, window_bounds = array<i64: 128, 1>}, {transform_indices = @transform_2, window_bounds = array<i64: 4, 128, 1>}, {pipeline_mode = #tpu.pipeline_mode<synchronous>, transform_indices = @transform_3, window_bounds = array<i64: 64, 200>}, {pipeline_mode = #tpu.pipeline_mode<synchronous>, transform_indices = @transform_4, window_bounds = array<i64: 64, 200>}, {transform_indices = @transform_5, window_bounds = array<i64: 1, 128>}]} {
    %0 = tpu.iota {dimensions = array<i32: 1>} : vector<128x64xi32>
    %c0 = arith.constant 0 : index
    %c0_0 = arith.constant 0 : index
    %1 = vector.load %arg1[%c0, %c0_0] : memref<128x1xi32, #tpu.memory_space<vmem>>, vector<128x1xi32>
    %2 = vector.broadcast %1 : vector<128x1xi32> to vector<128x64xi32>
    %3 = arith.cmpi eq, %2, %0 : vector<128x64xi32>
    %4 = arith.extui %3 : vector<128x64xi1> to vector<128x64xi32>
    %5 = arith.sitofp %4 : vector<128x64xi32> to vector<128x64xf32>
    %c0_1 = arith.constant 0 : index
    %c0_2 = arith.constant 0 : index
    %6 = vector.load %arg4[%c0_1, %c0_2] : memref<64x200xf32, #tpu.memory_space<vmem>>, vector<64x200xf32>
    %cst = arith.constant dense<0.000000e+00> : vector<128x200xf32>
    %7 = tpu.matmul %5, %6, %cst {dimension_numbers = #tpu.dot_dimension_numbers<[1], [0], [0], [1], [0, 0, 1, 1], [], []>} : vector<128x64xf32>, vector<64x200xf32>, vector<128x200xf32> -> vector<128x200xf32>
    %c0_3 = arith.constant 0 : index
    %c0_4 = arith.constant 0 : index
    %8 = vector.load %arg5[%c0_3, %c0_4] : memref<64x200xf32, #tpu.memory_space<vmem>>, vector<64x200xf32>
    %cst_5 = arith.constant dense<0.000000e+00> : vector<128x64xf32>
    %9 = tpu.matmul %7, %8, %cst_5 {dimension_numbers = #tpu.dot_dimension_numbers<[1], [1], [0], [0], [0, 0, 1, 0], [], []>} : vector<128x200xf32>, vector<64x200xf32>, vector<128x64xf32> -> vector<128x64xf32>
    %c0_6 = arith.constant 0 : index
    %c0_7 = arith.constant 0 : index
    %10 = vector.load %arg2[%c0_6, %c0_7] : memref<128x1xi32, #tpu.memory_space<vmem>>, vector<128x1xi32>
    %11 = vector.broadcast %10 : vector<128x1xi32> to vector<128x64xi32>
    %12 = arith.cmpi eq, %11, %0 : vector<128x64xi32>
    %cst_8 = arith.constant 0.000000e+00 : f32
    %13 = vector.broadcast %cst_8 : f32 to vector<128x64xf32>
    %14 = arith.select %12, %9, %13 : vector<128x64xi1>, vector<128x64xf32>
    %cst_9 = arith.constant dense<0.000000e+00> : vector<128xf32>
    %15 = vector.multi_reduction <add>, %14, %cst_9 [1] : vector<128x64xf32> to vector<128xf32>
    %cst_10 = arith.constant 0.000000e+00 : f32
    %16 = vector.broadcast %cst_10 : f32 to vector<128xf32>
    %17 = arith.minimumf %15, %16 : vector<128xf32>
    %18 = math.absf %15 : vector<128xf32>
    %cst_11 = arith.constant 0.000000e+00 : f32
    %19 = vector.broadcast %cst_11 : f32 to vector<128xf32>
    %20 = arith.subf %19, %18 : vector<128xf32>
    %21 = math.exp %20 : vector<128xf32>
    %22 = math.log1p %21 : vector<128xf32>
    %23 = arith.subf %17, %22 : vector<128xf32>
    %cst_12 = arith.constant 0.000000e+00 : f32
    %24 = vector.broadcast %cst_12 : f32 to vector<128xf32>
    %c0_i32 = arith.constant 0 : i32
    %25 = arith.index_cast %c0_i32 : i32 to index
    %c0_13 = arith.constant 0 : index
    %c0_14 = arith.constant 0 : index
    %26 = vector.load %arg3[%25, %c0_13, %c0_14] : memref<4x128x1xi32, #tpu.memory_space<vmem>>, vector<1x128x1xi32>
    %27 = vector.shape_cast %26 : vector<1x128x1xi32> to vector<128x1xi32>
    %28 = vector.broadcast %27 : vector<128x1xi32> to vector<128x64xi32>
    %29 = arith.cmpi eq, %28, %0 : vector<128x64xi32>
    %cst_15 = arith.constant 0.000000e+00 : f32
    %30 = vector.broadcast %cst_15 : f32 to vector<128x64xf32>
    %31 = arith.select %29, %9, %30 : vector<128x64xi1>, vector<128x64xf32>
    %cst_16 = arith.constant dense<0.000000e+00> : vector<128xf32>
    %32 = vector.multi_reduction <add>, %31, %cst_16 [1] : vector<128x64xf32> to vector<128xf32>
    %cst_17 = arith.constant 0.000000e+00 : f32
    %33 = vector.broadcast %cst_17 : f32 to vector<128xf32>
    %34 = arith.subf %33, %32 : vector<128xf32>
    %cst_18 = arith.constant 0.000000e+00 : f32
    %35 = vector.broadcast %cst_18 : f32 to vector<128xf32>
    %36 = arith.minimumf %34, %35 : vector<128xf32>
    %37 = math.absf %34 : vector<128xf32>
    %cst_19 = arith.constant 0.000000e+00 : f32
    %38 = vector.broadcast %cst_19 : f32 to vector<128xf32>
    %39 = arith.subf %38, %37 : vector<128xf32>
    %40 = math.exp %39 : vector<128xf32>
    %41 = math.log1p %40 : vector<128xf32>
    %42 = arith.subf %36, %41 : vector<128xf32>
    %43 = arith.addf %24, %42 : vector<128xf32>
    %c1_i32 = arith.constant 1 : i32
    %44 = arith.index_cast %c1_i32 : i32 to index
    %c0_20 = arith.constant 0 : index
    %c0_21 = arith.constant 0 : index
    %45 = vector.load %arg3[%44, %c0_20, %c0_21] : memref<4x128x1xi32, #tpu.memory_space<vmem>>, vector<1x128x1xi32>
    %46 = vector.shape_cast %45 : vector<1x128x1xi32> to vector<128x1xi32>
    %47 = vector.broadcast %46 : vector<128x1xi32> to vector<128x64xi32>
    %48 = arith.cmpi eq, %47, %0 : vector<128x64xi32>
    %cst_22 = arith.constant 0.000000e+00 : f32
    %49 = vector.broadcast %cst_22 : f32 to vector<128x64xf32>
    %50 = arith.select %48, %9, %49 : vector<128x64xi1>, vector<128x64xf32>
    %cst_23 = arith.constant dense<0.000000e+00> : vector<128xf32>
    %51 = vector.multi_reduction <add>, %50, %cst_23 [1] : vector<128x64xf32> to vector<128xf32>
    %cst_24 = arith.constant 0.000000e+00 : f32
    %52 = vector.broadcast %cst_24 : f32 to vector<128xf32>
    %53 = arith.subf %52, %51 : vector<128xf32>
    %cst_25 = arith.constant 0.000000e+00 : f32
    %54 = vector.broadcast %cst_25 : f32 to vector<128xf32>
    %55 = arith.minimumf %53, %54 : vector<128xf32>
    %56 = math.absf %53 : vector<128xf32>
    %cst_26 = arith.constant 0.000000e+00 : f32
    %57 = vector.broadcast %cst_26 : f32 to vector<128xf32>
    %58 = arith.subf %57, %56 : vector<128xf32>
    %59 = math.exp %58 : vector<128xf32>
    %60 = math.log1p %59 : vector<128xf32>
    %61 = arith.subf %55, %60 : vector<128xf32>
    %62 = arith.addf %43, %61 : vector<128xf32>
    %c2_i32 = arith.constant 2 : i32
    %63 = arith.index_cast %c2_i32 : i32 to index
    %c0_27 = arith.constant 0 : index
    %c0_28 = arith.constant 0 : index
    %64 = vector.load %arg3[%63, %c0_27, %c0_28] : memref<4x128x1xi32, #tpu.memory_space<vmem>>, vector<1x128x1xi32>
    %65 = vector.shape_cast %64 : vector<1x128x1xi32> to vector<128x1xi32>
    %66 = vector.broadcast %65 : vector<128x1xi32> to vector<128x64xi32>
    %67 = arith.cmpi eq, %66, %0 : vector<128x64xi32>
    %cst_29 = arith.constant 0.000000e+00 : f32
    %68 = vector.broadcast %cst_29 : f32 to vector<128x64xf32>
    %69 = arith.select %67, %9, %68 : vector<128x64xi1>, vector<128x64xf32>
    %cst_30 = arith.constant dense<0.000000e+00> : vector<128xf32>
    %70 = vector.multi_reduction <add>, %69, %cst_30 [1] : vector<128x64xf32> to vector<128xf32>
    %cst_31 = arith.constant 0.000000e+00 : f32
    %71 = vector.broadcast %cst_31 : f32 to vector<128xf32>
    %72 = arith.subf %71, %70 : vector<128xf32>
    %cst_32 = arith.constant 0.000000e+00 : f32
    %73 = vector.broadcast %cst_32 : f32 to vector<128xf32>
    %74 = arith.minimumf %72, %73 : vector<128xf32>
    %75 = math.absf %72 : vector<128xf32>
    %cst_33 = arith.constant 0.000000e+00 : f32
    %76 = vector.broadcast %cst_33 : f32 to vector<128xf32>
    %77 = arith.subf %76, %75 : vector<128xf32>
    %78 = math.exp %77 : vector<128xf32>
    %79 = math.log1p %78 : vector<128xf32>
    %80 = arith.subf %74, %79 : vector<128xf32>
    %81 = arith.addf %62, %80 : vector<128xf32>
    %c3_i32 = arith.constant 3 : i32
    %82 = arith.index_cast %c3_i32 : i32 to index
    %c0_34 = arith.constant 0 : index
    %c0_35 = arith.constant 0 : index
    %83 = vector.load %arg3[%82, %c0_34, %c0_35] : memref<4x128x1xi32, #tpu.memory_space<vmem>>, vector<1x128x1xi32>
    %84 = vector.shape_cast %83 : vector<1x128x1xi32> to vector<128x1xi32>
    %85 = vector.broadcast %84 : vector<128x1xi32> to vector<128x64xi32>
    %86 = arith.cmpi eq, %85, %0 : vector<128x64xi32>
    %cst_36 = arith.constant 0.000000e+00 : f32
    %87 = vector.broadcast %cst_36 : f32 to vector<128x64xf32>
    %88 = arith.select %86, %9, %87 : vector<128x64xi1>, vector<128x64xf32>
    %cst_37 = arith.constant dense<0.000000e+00> : vector<128xf32>
    %89 = vector.multi_reduction <add>, %88, %cst_37 [1] : vector<128x64xf32> to vector<128xf32>
    %cst_38 = arith.constant 0.000000e+00 : f32
    %90 = vector.broadcast %cst_38 : f32 to vector<128xf32>
    %91 = arith.subf %90, %89 : vector<128xf32>
    %cst_39 = arith.constant 0.000000e+00 : f32
    %92 = vector.broadcast %cst_39 : f32 to vector<128xf32>
    %93 = arith.minimumf %91, %92 : vector<128xf32>
    %94 = math.absf %91 : vector<128xf32>
    %cst_40 = arith.constant 0.000000e+00 : f32
    %95 = vector.broadcast %cst_40 : f32 to vector<128xf32>
    %96 = arith.subf %95, %94 : vector<128xf32>
    %97 = math.exp %96 : vector<128xf32>
    %98 = math.log1p %97 : vector<128xf32>
    %99 = arith.subf %93, %98 : vector<128xf32>
    %100 = arith.addf %81, %99 : vector<128xf32>
    %c4_i32 = arith.constant 4 : i32
    %101 = arith.addf %23, %100 : vector<128xf32>
    %102 = tpu.iota {dimensions = array<i32: 1>} : vector<1x128xi32>
    %c128_i32 = arith.constant 128 : i32
    %103 = arith.muli %arg0, %c128_i32 : i32
    %104 = vector.broadcast %103 : i32 to vector<1x128xi32>
    %105 = arith.addi %102, %104 : vector<1x128xi32>
    %c8_i32 = arith.constant 8 : i32
    %106 = vector.broadcast %c8_i32 : i32 to vector<1x128xi32>
    %107 = arith.cmpi slt, %105, %106 : vector<1x128xi32>
    %108 = vector.shape_cast %101 : vector<128xf32> to vector<1x128xf32>
    %cst_41 = arith.constant 0.000000e+00 : f32
    %109 = vector.broadcast %cst_41 : f32 to vector<1x128xf32>
    %110 = arith.select %107, %108, %109 : vector<1x128xi1>, vector<1x128xf32>
    %c0_42 = arith.constant 0 : index
    %c0_43 = arith.constant 0 : index
    %111 = vector.load %arg6[%c0_42, %c0_43] : memref<1x128xf32, #tpu.memory_space<vmem>>, vector<1x128xf32>
    tpu.vector_store %arg6[%c0_42, %c0_43], %110 {strides = array<i32>} : memref<1x128xf32, #tpu.memory_space<vmem>>, vector<1x128xf32>,
    return
  }
  func.func @transform_0(%arg0: i32) -> (i32, i32) {
    %c0_i32 = arith.constant 0 : i32
    %c0_i32_0 = arith.constant 0 : i32
    return %arg0, %c0_i32 : i32, i32
  }
  func.func @transform_1(%arg0: i32) -> (i32, i32) {
    %c0_i32 = arith.constant 0 : i32
    %c0_i32_0 = arith.constant 0 : i32
    return %arg0, %c0_i32 : i32, i32
  }
  func.func @transform_2(%arg0: i32) -> (i32, i32, i32) {
    %c0_i32 = arith.constant 0 : i32
    %c0_i32_0 = arith.constant 0 : i32
    %c0_i32_1 = arith.constant 0 : i32
    return %c0_i32, %arg0, %c0_i32_0 : i32, i32, i32
  }
  func.func @transform_3(%arg0: i32) -> (i32, i32) {
    %c0_i32 = arith.constant 0 : i32
    %c0_i32_0 = arith.constant 0 : i32
    %c0_i32_1 = arith.constant 0 : i32
    return %c0_i32, %c0_i32_0 : i32, i32
  }
  func.func @transform_4(%arg0: i32) -> (i32, i32) {
    %c0_i32 = arith.constant 0 : i32
    %c0_i32_0 = arith.constant 0 : i32
    %c0_i32_1 = arith.constant 0 : i32
    return %c0_i32, %c0_i32_0 : i32, i32
  }
  func.func @transform_5(%arg0: i32) -> (i32, i32) {
    %c0_i32 = arith.constant 0 : i32
    %c0_i32_0 = arith.constant 0 : i32
    return %c0_i32, %arg0 : i32, i32
  }
}

</mosaic_0001>

<llo_original>
// kernel: tpu_custom_call.1
$region0: #{tpu_custom_call.1}
  #allocation0 [shape = 'u32[]', space=smem, size = 0x4, offset = 0x4, fixed_abs, tag = 'smem constant byte address 0x4 - core index']
  #allocation1 [shape = 'u32[144,128]{1,0:T(1,128)}', space=vmem, size = 0x12000, scoped, tag = 'internal scratch']
  %s0 = inlined_call_operand.vmem [shape: s32[128,1], index: 0, kind: input, shape index: {}]
  %s1 = inlined_call_operand.vmem [shape: s32[128,1], index: 1, kind: input, shape index: {}]
  %s2 = inlined_call_operand.vmem [shape: s32[4,128,1], index: 2, kind: input, shape index: {}]
  %s3 = inlined_call_operand.vmem [shape: f32[64,200], index: 3, kind: input, shape index: {}]
  %s4 = inlined_call_operand.vmem [shape: f32[64,200], index: 4, kind: input, shape index: {}]
  %s5 = inlined_call_operand.hbm [shape: f32[1,128], index: 5, kind: output, shape index: {}]
  %s6 = sld [smem:[#allocation0]]
  $region30: #{tpu_custom_call.1} parent=0
    _
  %s8 = ssub.s32 1, %s6
  %s9 = scalar_select 0, %s8, %s6
  $region1: #{tpu_custom_call.1} parent=0
    #allocation2 [shape = 'u8[512]{0}', space=vmem, size = 0x400, scoped, tag = 'output window, operand 0, single buffered']
    #allocation3 [shape = 's32[1]{0}', space=sflag, size = 0x4, scoped, tag = 'scoped memory for tpu_custom_call.1']
    %10 = vsyncpa [#allocation3], 0
    // Predicated region
    $region2: #{tpu_custom_call.1} parent=1 // pred_check
      _
    $region3: #{tpu_custom_call.1} parent=1 // pred_check_branch
      %12 = sbr.rel (0) target = $region5
    $region4: #{tpu_custom_call.1} parent=1 // pred_region
      _
    $region5: #{tpu_custom_call.1} parent=1 // pred_fallthru
      _
    // Predicated region
    $region6: #{tpu_custom_call.1} parent=1 // pred_check
      _
    $region7: #{tpu_custom_call.1} parent=1 // pred_check_branch
      %14 = sbr.rel (0) target = $region9
    $region8: #{tpu_custom_call.1} parent=1 // pred_region
      _
    $region9: #{tpu_custom_call.1} parent=1 // pred_fallthru
      _
    // Predicated region
    $region10: #{tpu_custom_call.1} parent=1 // pred_check
      _
    $region11: #{tpu_custom_call.1} parent=1 // pred_check_branch
      %16 = sbr.rel (0) target = $region13
    $region12: #{tpu_custom_call.1} parent=1 // pred_region
      _
    $region13: #{tpu_custom_call.1} parent=1 // pred_fallthru
      _
    // Predicated region
    $region14: #{tpu_custom_call.1} parent=1 // pred_check
      _
    $region15: #{tpu_custom_call.1} parent=1 // pred_check_branch
      %18 = sbr.rel (0) target = $region17
    $region16: #{tpu_custom_call.1} parent=1 // pred_region
      _
    $region17: #{tpu_custom_call.1} parent=1 // pred_fallthru
      _
    // Predicated region
    $region18: #{tpu_custom_call.1} parent=1 // pred_check
      _
    $region19: #{tpu_custom_call.1} parent=1 // pred_check_branch
      %20 = sbr.rel (0) target = $region21
    $region20: #{tpu_custom_call.1} parent=1 // pred_region
      _
    $region21: #{tpu_custom_call.1} parent=1 // pred_fallthru
      _
    %v21 = vlaneseq
    %v22 = vand.u32 %v21, 127
    %v23 = vld [vmem:[%s0] sm:$0xff]
    %v24 = vld [vmem:[%s0 + $0x8] sm:$0xff]
    %v25 = vld [vmem:[%s0 + $0x10] sm:$0xff]
    %v26 = vld [vmem:[%s0 + $0x18] sm:$0xff]
    %v27 = vld [vmem:[%s0 + $0x20] sm:$0xff]
    %v28 = vld [vmem:[%s0 + $0x28] sm:$0xff]
    %v29 = vld [vmem:[%s0 + $0x30] sm:$0xff]
    %v30 = vld [vmem:[%s0 + $0x38] sm:$0xff]
    %v31 = vld [vmem:[%s0 + $0x40] sm:$0xff]
    %v32 = vld [vmem:[%s0 + $0x48] sm:$0xff]
    %v33 = vld [vmem:[%s0 + $0x50] sm:$0xff]
    %v34 = vld [vmem:[%s0 + $0x58] sm:$0xff]
    %v35 = vld [vmem:[%s0 + $0x60] sm:$0xff]
    %v36 = vld [vmem:[%s0 + $0x68] sm:$0xff]
    %v37 = vld [vmem:[%s0 + $0x70] sm:$0xff]
    %v38 = vld [vmem:[%s0 + $0x78] sm:$0xff]
    %39 = vset.pattern.permute.xlu0 0
    %40 = vperm.xlu0 %39, %v23
    %v41 = vpop.permute.xlu0 %40
    %42 = vset.pattern.permute.xlu0 0
    %43 = vperm.xlu0 %42, %v24
    %v44 = vpop.permute.xlu0 %43
    %45 = vset.pattern.permute.xlu0 0
    %46 = vperm.xlu0 %45, %v25
    %v47 = vpop.permute.xlu0 %46
    %48 = vset.pattern.permute.xlu0 0
    %49 = vperm.xlu0 %48, %v26
    %v50 = vpop.permute.xlu0 %49
    %51 = vset.pattern.permute.xlu0 0
    %52 = vperm.xlu0 %51, %v27
    %v53 = vpop.permute.xlu0 %52
    %54 = vset.pattern.permute.xlu0 0
    %55 = vperm.xlu0 %54, %v28
    %v56 = vpop.permute.xlu0 %55
    %57 = vset.pattern.permute.xlu0 0
    %58 = vperm.xlu0 %57, %v29
    %v59 = vpop.permute.xlu0 %58
    %60 = vset.pattern.permute.xlu0 0
    %61 = vperm.xlu0 %60, %v30
    %v62 = vpop.permute.xlu0 %61
    %63 = vset.pattern.permute.xlu0 0
    %64 = vperm.xlu0 %63, %v31
    %v65 = vpop.permute.xlu0 %64
    %66 = vset.pattern.permute.xlu0 0
    %67 = vperm.xlu0 %66, %v32
    %v68 = vpop.permute.xlu0 %67
    %69 = vset.pattern.permute.xlu0 0
    %70 = vperm.xlu0 %69, %v33
    %v71 = vpop.permute.xlu0 %70
    %72 = vset.pattern.permute.xlu0 0
    %73 = vperm.xlu0 %72, %v34
    %v74 = vpop.permute.xlu0 %73
    %75 = vset.pattern.permute.xlu0 0
    %76 = vperm.xlu0 %75, %v35
    %v77 = vpop.permute.xlu0 %76
    %78 = vset.pattern.permute.xlu0 0
    %79 = vperm.xlu0 %78, %v36
    %v80 = vpop.permute.xlu0 %79
    %81 = vset.pattern.permute.xlu0 0
    %82 = vperm.xlu0 %81, %v37
    %v83 = vpop.permute.xlu0 %82
    %84 = vset.pattern.permute.xlu0 0
    %85 = vperm.xlu0 %84, %v38
    %v86 = vpop.permute.xlu0 %85
    %vm87 = vcmp.eq.s32.totalorder %v41, %v22
    %vm88 = vcmp.eq.s32.totalorder %v44, %v22
    %vm89 = vcmp.eq.s32.totalorder %v47, %v22
    %vm90 = vcmp.eq.s32.totalorder %v50, %v22
    %vm91 = vcmp.eq.s32.totalorder %v53, %v22
    %vm92 = vcmp.eq.s32.totalorder %v56, %v22
    %vm93 = vcmp.eq.s32.totalorder %v59, %v22
    %vm94 = vcmp.eq.s32.totalorder %v62, %v22
    %vm95 = vcmp.eq.s32.totalorder %v65, %v22
    %vm96 = vcmp.eq.s32.totalorder %v68, %v22
    %vm97 = vcmp.eq.s32.totalorder %v71, %v22
    %vm98 = vcmp.eq.s32.totalorder %v74, %v22
    %vm99 = vcmp.eq.s32.totalorder %v77, %v22
    %vm100 = vcmp.eq.s32.totalorder %v80, %v22
    %vm101 = vcmp.eq.s32.totalorder %v83, %v22
    %vm102 = vcmp.eq.s32.totalorder %v86, %v22
    %v103 = vsel %vm87, 1, 0
    %v104 = vsel %vm88, 1, 0
    %v105 = vsel %vm89, 1, 0
    %v106 = vsel %vm90, 1, 0
    %v107 = vsel %vm91, 1, 0
    %v108 = vsel %vm92, 1, 0
    %v109 = vsel %vm93, 1, 0
    %v110 = vsel %vm94, 1, 0
    %v111 = vsel %vm95, 1, 0
    %v112 = vsel %vm96, 1, 0
    %v113 = vsel %vm97, 1, 0
    %v114 = vsel %vm98, 1, 0
    %v115 = vsel %vm99, 1, 0
    %v116 = vsel %vm100, 1, 0
    %v117 = vsel %vm101, 1, 0
    %v118 = vsel %vm102, 1, 0
    %v119 = vcvt.s32.f32 %v103
    %v120 = vcvt.s32.f32 %v104
    %v121 = vcvt.s32.f32 %v105
    %v122 = vcvt.s32.f32 %v106
    %v123 = vcvt.s32.f32 %v107
    %v124 = vcvt.s32.f32 %v108
    %v125 = vcvt.s32.f32 %v109
    %v126 = vcvt.s32.f32 %v110
    %v127 = vcvt.s32.f32 %v111
    %v128 = vcvt.s32.f32 %v112
    %v129 = vcvt.s32.f32 %v113
    %v130 = vcvt.s32.f32 %v114
    %v131 = vcvt.s32.f32 %v115
    %v132 = vcvt.s32.f32 %v116
    %v133 = vcvt.s32.f32 %v117
    %v134 = vcvt.s32.f32 %v118
    %v135 = vld [vmem:[%s3] sm:$0xff]
    %v136 = vld [vmem:[%s3 + $0x8] sm:$0xff]
    %v137 = vld [vmem:[%s3 + $0x10] sm:$0xff]
    %v138 = vld [vmem:[%s3 + $0x18] sm:$0xff]
    %v139 = vld [vmem:[%s3 + $0x20] sm:$0xff]
    %v140 = vld [vmem:[%s3 + $0x28] sm:$0xff]
    %v141 = vld [vmem:[%s3 + $0x30] sm:$0xff]
    %v142 = vld [vmem:[%s3 + $0x38] sm:$0xff]
    %v143 = vld [vmem:[%s3 + $0x40] sm:$0xff]
    %v144 = vld [vmem:[%s3 + $0x48] sm:$0xff]
    %v145 = vld [vmem:[%s3 + $0x50] sm:$0xff]
    %v146 = vld [vmem:[%s3 + $0x58] sm:$0xff]
    %v147 = vld [vmem:[%s3 + $0x60] sm:$0xff]
    %v148 = vld [vmem:[%s3 + $0x68] sm:$0xff]
    %v149 = vld [vmem:[%s3 + $0x70] sm:$0xff]
    %v150 = vld [vmem:[%s3 + $0x78] sm:$0xff]
    %vm151 = vcmask 523264
    %v153 = vsel %vm151, %v119, 0
    %v156 = vsel %vm151, %v120, 0
    %v159 = vsel %vm151, %v121, 0
    %v162 = vsel %vm151, %v122, 0
    %v165 = vsel %vm151, %v123, 0
    %v168 = vsel %vm151, %v124, 0
    %v171 = vsel %vm151, %v125, 0
    %v174 = vsel %vm151, %v126, 0
    %v177 = vsel %vm151, %v127, 0
    %v180 = vsel %vm151, %v128, 0
    %v183 = vsel %vm151, %v129, 0
    %v186 = vsel %vm151, %v130, 0
    %v189 = vsel %vm151, %v131, 0
    %v192 = vsel %vm151, %v132, 0
    %v195 = vsel %vm151, %v133, 0
    %v198 = vsel %vm151, %v134, 0
    %200 = vmatprep.subr.mxu0 %v136
    %201 = vmatpush1.msra.mxu0 %v135
    %202 = vmatprep.subr.mxu0 %v138
    %203 = vmatpush1.msra.mxu0 %v137
    %204 = vmatprep.subr.mxu0 %v140
    %205 = vmatpush1.msra.mxu0 %v139
    %206 = vmatprep.subr.mxu0 %v142
    %207 = vmatpush1.msra.mxu0 %v141
    %208 = vmatprep.subr.mxu0 %v144
    %209 = vmatpush1.msra.mxu0 %v143
    %210 = vmatprep.subr.mxu0 %v146
    %211 = vmatpush1.msra.mxu0 %v145
    %212 = vmatprep.subr.mxu0 %v148
    %213 = vmatpush1.msra.mxu0 %v147
    %214 = vmatprep.subr.mxu0 %v150
    %215 = vmatpush1.msra.mxu0 %v149
    %216 = vmatprep.subr.mxu0 0.0
    %217 = vmatpush1.msra.mxu0 0.0
    %218 = vmatprep.subr.mxu0 0.0
    %219 = vmatpush1.msra.mxu0 0.0
    %220 = vmatprep.subr.mxu0 0.0
    %221 = vmatpush1.msra.mxu0 0.0
    %222 = vmatprep.subr.mxu0 0.0
    %223 = vmatpush1.msra.mxu0 0.0
    %224 = vmatprep.subr.mxu0 0.0
    %225 = vmatpush1.msra.mxu0 0.0
    %226 = vmatprep.subr.mxu0 0.0
    %227 = vmatpush1.msra.mxu0 0.0
    %228 = vmatprep.subr.mxu0 0.0
    %229 = vmatpush1.msra.mxu0 0.0
    %230 = vmatprep.subr.mxu0 0.0
    %231 = vmatpush1.msra.mxu0 0.0
    %232 = vmatprep.subr.mxu0 0.0
    %233 = vmatpush1.msra.mxu0 0.0
    %234 = vmatprep.subr.mxu0 0.0
    %235 = vmatpush1.msra.mxu0 0.0
    %236 = vmatprep.subr.mxu0 0.0
    %237 = vmatpush1.msra.mxu0 0.0
    %238 = vmatprep.subr.mxu0 0.0
    %239 = vmatpush1.msra.mxu0 0.0
    %240 = vmatprep.subr.mxu0 0.0
    %241 = vmatpush1.msra.mxu0 0.0
    %242 = vmatprep.subr.mxu0 0.0
    %243 = vmatpush1.msra.mxu0 0.0
    %244 = vmatprep.subr.mxu0 0.0
    %245 = vmatpush1.msra.mxu0 0.0
    %246 = vmatprep.subr.mxu0 0.0
    %247 = vmatpush1.msra.mxu0 0.0
    %248 = vmatprep.subr.mxu0 0.0
    %249 = vmatpush1.msra.mxu0 0.0
    %250 = vmatprep.subr.mxu0 0.0
    %251 = vmatpush1.msra.mxu0 0.0
    %252 = vmatprep.subr.mxu0 0.0
    %253 = vmatpush1.msra.mxu0 0.0
    %254 = vmatprep.subr.mxu0 0.0
    %255 = vmatpush1.msra.mxu0 0.0
    %256 = vmatprep.subr.mxu0 0.0
    %257 = vmatpush1.msra.mxu0 0.0
    %258 = vmatprep.subr.mxu0 0.0
    %259 = vmatpush1.msra.mxu0 0.0
    %260 = vmatprep.subr.mxu0 0.0
    %261 = vmatpush1.msra.mxu0 0.0
    %262 = vmatprep.subr.mxu0 0.0
    %263 = vmatpush1.msra.mxu0 0.0
    %264 = vmatprep.mubr.f32.mxu0 0.0
    %265 = vmatmul.mubr.f32.gmra.mrb[0].mxu0 %v153
    %v266 = vpop.f32.mrb[0].mxu0
    %v267 = vadd.f32 0.0, %v266
    %v268 = vpop.f32.mrb[0].mxu0
    %v269 = vadd.f32 0.0, %v268
    %270 = vmatprep.mubr.f32.mxu0 0.0
    %271 = vmatmul.mubr.f32.gmra.mrb[0].mxu0 %v156
    %v272 = vpop.f32.mrb[0].mxu0
    %v273 = vadd.f32 0.0, %v272
    %v274 = vpop.f32.mrb[0].mxu0
    %v275 = vadd.f32 0.0, %v274
    %276 = vmatprep.mubr.f32.mxu0 0.0
    %277 = vmatmul.mubr.f32.gmra.mrb[0].mxu0 %v159
    %v278 = vpop.f32.mrb[0].mxu0
    %v279 = vadd.f32 0.0, %v278
    %v280 = vpop.f32.mrb[0].mxu0
    %v281 = vadd.f32 0.0, %v280
    %282 = vmatprep.mubr.f32.mxu0 0.0
    %283 = vmatmul.mubr.f32.gmra.mrb[0].mxu0 %v162
    %v284 = vpop.f32.mrb[0].mxu0
    %v285 = vadd.f32 0.0, %v284
    %v286 = vpop.f32.mrb[0].mxu0
    %v287 = vadd.f32 0.0, %v286
    %288 = vmatprep.mubr.f32.mxu0 0.0
    %289 = vmatmul.mubr.f32.gmra.mrb[0].mxu0 %v165
    %v290 = vpop.f32.mrb[0].mxu0
    %v291 = vadd.f32 0.0, %v290
    %v292 = vpop.f32.mrb[0].mxu0
    %v293 = vadd.f32 0.0, %v292
    %294 = vmatprep.mubr.f32.mxu0 0.0
    %295 = vmatmul.mubr.f32.gmra.mrb[0].mxu0 %v168
    %v296 = vpop.f32.mrb[0].mxu0
    %v297 = vadd.f32 0.0, %v296
    %v298 = vpop.f32.mrb[0].mxu0
    %v299 = vadd.f32 0.0, %v298
    %300 = vmatprep.mubr.f32.mxu0 0.0
    %301 = vmatmul.mubr.f32.gmra.mrb[0].mxu0 %v171
    %v302 = vpop.f32.mrb[0].mxu0
    %v303 = vadd.f32 0.0, %v302
    %v304 = vpop.f32.mrb[0].mxu0
    %v305 = vadd.f32 0.0, %v304
    %306 = vmatprep.mubr.f32.mxu0 0.0
    %307 = vmatmul.mubr.f32.gmra.mrb[0].mxu0 %v174
    %v308 = vpop.f32.mrb[0].mxu0
    %v309 = vadd.f32 0.0, %v308
    %v310 = vpop.f32.mrb[0].mxu0
    %v311 = vadd.f32 0.0, %v310
    %312 = vmatprep.mubr.f32.mxu0 0.0
    %313 = vmatmul.mubr.f32.gmra.mrb[0].mxu0 %v177
    %v314 = vpop.f32.mrb[0].mxu0
    %v315 = vadd.f32 0.0, %v314
    %v316 = vpop.f32.mrb[0].mxu0
    %v317 = vadd.f32 0.0, %v316
    %318 = vmatprep.mubr.f32.mxu0 0.0
    %319 = vmatmul.mubr.f32.gmra.mrb[0].mxu0 %v180
    %v320 = vpop.f32.mrb[0].mxu0
    %v321 = vadd.f32 0.0, %v320
    %v322 = vpop.f32.mrb[0].mxu0
    %v323 = vadd.f32 0.0, %v322
    %324 = vmatprep.mubr.f32.mxu0 0.0
    %325 = vmatmul.mubr.f32.gmra.mrb[0].mxu0 %v183
    %v326 = vpop.f32.mrb[0].mxu0
    %v327 = vadd.f32 0.0, %v326
    %v328 = vpop.f32.mrb[0].mxu0
    %v329 = vadd.f32 0.0, %v328
    %330 = vmatprep.mubr.f32.mxu0 0.0
    %331 = vmatmul.mubr.f32.gmra.mrb[0].mxu0 %v186
    %v332 = vpop.f32.mrb[0].mxu0
    %v333 = vadd.f32 0.0, %v332
    %v334 = vpop.f32.mrb[0].mxu0
    %v335 = vadd.f32 0.0, %v334
    %336 = vmatprep.mubr.f32.mxu0 0.0
    %337 = vmatmul.mubr.f32.gmra.mrb[0].mxu0 %v189
    %v338 = vpop.f32.mrb[0].mxu0
    %v339 = vadd.f32 0.0, %v338
    %v340 = vpop.f32.mrb[0].mxu0
    %v341 = vadd.f32 0.0, %v340
    %342 = vmatprep.mubr.f32.mxu0 0.0
    %343 = vmatmul.mubr.f32.gmra.mrb[0].mxu0 %v192
    %v344 = vpop.f32.mrb[0].mxu0
    %v345 = vadd.f32 0.0, %v344
    %v346 = vpop.f32.mrb[0].mxu0
    %v347 = vadd.f32 0.0, %v346
    %348 = vmatprep.mubr.f32.mxu0 0.0
    %349 = vmatmul.mubr.f32.gmra.mrb[0].mxu0 %v195
    %v350 = vpop.f32.mrb[0].mxu0
    %v351 = vadd.f32 0.0, %v350
    %v352 = vpop.f32.mrb[0].mxu0
    %v353 = vadd.f32 0.0, %v352
    %354 = vmatprep.mubr.f32.mxu0 0.0
    %355 = vmatmul.mubr.f32.gmra.mrb[0].mxu0 %v198
    %v356 = vpop.f32.mrb[0].mxu0
    %v357 = vadd.f32 0.0, %v356
    %v358 = vpop.f32.mrb[0].mxu0
    %v359 = vadd.f32 0.0, %v358
    %360 = vdwg.mxu0
    %v361 = vld [vmem:[%s4] sm:$0xff]
    %v362 = vld [vmem:[%s4 + $0x8] sm:$0xff]
    %v363 = vld [vmem:[%s4 + $0x10] sm:$0xff]
    %v364 = vld [vmem:[%s4 + $0x18] sm:$0xff]
    %v365 = vld [vmem:[%s4 + $0x20] sm:$0xff]
    %v366 = vld [vmem:[%s4 + $0x28] sm:$0xff]
    %v367 = vld [vmem:[%s4 + $0x30] sm:$0xff]
    %v368 = vld [vmem:[%s4 + $0x38] sm:$0xff]
    %v369 = vld [vmem:[%s4 + $0x40] sm:$0xff]
    %v370 = vld [vmem:[%s4 + $0x48] sm:$0xff]
    %v371 = vld [vmem:[%s4 + $0x50] sm:$0xff]
    %v372 = vld [vmem:[%s4 + $0x58] sm:$0xff]
    %v373 = vld [vmem:[%s4 + $0x60] sm:$0xff]
    %v374 = vld [vmem:[%s4 + $0x68] sm:$0xff]
    %v375 = vld [vmem:[%s4 + $0x70] sm:$0xff]
    %v376 = vld [vmem:[%s4 + $0x78] sm:$0xff]
    %vm377 = vcmask 588800
    %v379 = vsel %vm377, %v269, 0
    %v382 = vsel %vm377, %v275, 0
    %v385 = vsel %vm377, %v281, 0
    %v388 = vsel %vm377, %v287, 0
    %v391 = vsel %vm377, %v293, 0
    %v394 = vsel %vm377, %v299, 0
    %v397 = vsel %vm377, %v305, 0
    %v400 = vsel %vm377, %v311, 0
    %v403 = vsel %vm377, %v317, 0
    %v406 = vsel %vm377, %v323, 0
    %v409 = vsel %vm377, %v329, 0
    %v412 = vsel %vm377, %v335, 0
    %v415 = vsel %vm377, %v341, 0
    %v418 = vsel %vm377, %v347, 0
    %v421 = vsel %vm377, %v353, 0
    %v424 = vsel %vm377, %v359, 0
    %v427 = vsel %vm377, %v362, 0
    %v430 = vsel %vm377, %v364, 0
    %v433 = vsel %vm377, %v366, 0
    %v436 = vsel %vm377, %v368, 0
    %v439 = vsel %vm377, %v370, 0
    %v442 = vsel %vm377, %v372, 0
    %v445 = vsel %vm377, %v374, 0
    %v448 = vsel %vm377, %v376, 0
    %450 = vmatprep.subr.mxu0 %v427
    %451 = vmatpush1.xpose.msra.mxu0 %v361
    %452 = vmatprep.subr.mxu0 %v430
    %453 = vmatpush1.xpose.msra.mxu0 %v363
    %454 = vmatprep.subr.mxu0 %v433
    %455 = vmatpush1.xpose.msra.mxu0 %v365
    %456 = vmatprep.subr.mxu0 %v436
    %457 = vmatpush1.xpose.msra.mxu0 %v367
    %458 = vmatprep.subr.mxu0 %v439
    %459 = vmatpush1.xpose.msra.mxu0 %v369
    %460 = vmatprep.subr.mxu0 %v442
    %461 = vmatpush1.xpose.msra.mxu0 %v371
    %462 = vmatprep.subr.mxu0 %v445
    %463 = vmatpush1.xpose.msra.mxu0 %v373
    %464 = vmatprep.subr.mxu0 %v448
    %465 = vmatpush1.xpose.msra.mxu0 %v375
    %466 = vmatprep.subr.mxu0 0.0
    %467 = vmatpush1.xpose.msra.mxu0 0.0
    %468 = vmatprep.subr.mxu0 0.0
    %469 = vmatpush1.xpose.msra.mxu0 0.0
    %470 = vmatprep.subr.mxu0 0.0
    %471 = vmatpush1.xpose.msra.mxu0 0.0
    %472 = vmatprep.subr.mxu0 0.0
    %473 = vmatpush1.xpose.msra.mxu0 0.0
    %474 = vmatprep.subr.mxu0 0.0
    %475 = vmatpush1.xpose.msra.mxu0 0.0
    %476 = vmatprep.subr.mxu0 0.0
    %477 = vmatpush1.xpose.msra.mxu0 0.0
    %478 = vmatprep.subr.mxu0 0.0
    %479 = vmatpush1.xpose.msra.mxu0 0.0
    %480 = vmatprep.subr.mxu0 0.0
    %481 = vmatpush1.xpose.msra.mxu0 0.0
    %482 = vmatprep.subr.mxu0 0.0
    %483 = vmatpush1.xpose.msra.mxu0 0.0
    %484 = vmatprep.subr.mxu0 0.0
    %485 = vmatpush1.xpose.msra.mxu0 0.0
    %486 = vmatprep.subr.mxu0 0.0
    %487 = vmatpush1.xpose.msra.mxu0 0.0
    %488 = vmatprep.subr.mxu0 0.0
    %489 = vmatpush1.xpose.msra.mxu0 0.0
    %490 = vmatprep.subr.mxu0 0.0
    %491 = vmatpush1.xpose.msra.mxu0 0.0
    %492 = vmatprep.subr.mxu0 0.0
    %493 = vmatpush1.xpose.msra.mxu0 0.0
    %494 = vmatprep.subr.mxu0 0.0
    %495 = vmatpush1.xpose.msra.mxu0 0.0
    %496 = vmatprep.subr.mxu0 0.0
    %497 = vmatpush1.xpose.msra.mxu0 0.0
    %498 = vmatprep.subr.mxu0 0.0
    %499 = vmatpush1.xpose.msra.mxu0 0.0
    %500 = vmatprep.subr.mxu0 0.0
    %501 = vmatpush1.xpose.msra.mxu0 0.0
    %502 = vmatprep.subr.mxu0 0.0
    %503 = vmatpush1.xpose.msra.mxu0 0.0
    %504 = vmatprep.subr.mxu0 0.0
    %505 = vmatpush1.xpose.msra.mxu0 0.0
    %506 = vmatprep.subr.mxu0 0.0
    %507 = vmatpush1.xpose.msra.mxu0 0.0
    %508 = vmatprep.subr.mxu0 0.0
    %509 = vmatpush1.xpose.msra.mxu0 0.0
    %510 = vmatprep.subr.mxu0 0.0
    %511 = vmatpush1.xpose.msra.mxu0 0.0
    %512 = vmatprep.subr.mxu0 0.0
    %513 = vmatpush1.xpose.msra.mxu0 0.0
    %514 = vmatprep.mubr.f32.mxu0 %v379
    %515 = vmatmul.mubr.f32.gmra.mrb[0].mxu0 %v267
    %v516 = vpop.f32.mrb[0].mxu0
    %v517 = vadd.f32 0.0, %v516
    %v518 = vpop.f32.mrb[0].mxu0
    %519 = vmatprep.mubr.f32.mxu0 %v382
    %520 = vmatmul.mubr.f32.gmra.mrb[0].mxu0 %v273
    %v521 = vpop.f32.mrb[0].mxu0
    %v522 = vadd.f32 0.0, %v521
    %v523 = vpop.f32.mrb[0].mxu0
    %524 = vmatprep.mubr.f32.mxu0 %v385
    %525 = vmatmul.mubr.f32.gmra.mrb[0].mxu0 %v279
    %v526 = vpop.f32.mrb[0].mxu0
    %v527 = vadd.f32 0.0, %v526
    %v528 = vpop.f32.mrb[0].mxu0
    %529 = vmatprep.mubr.f32.mxu0 %v388
    %530 = vmatmul.mubr.f32.gmra.mrb[0].mxu0 %v285
    %v531 = vpop.f32.mrb[0].mxu0
    %v532 = vadd.f32 0.0, %v531
    %v533 = vpop.f32.mrb[0].mxu0
    %534 = vmatprep.mubr.f32.mxu0 %v391
    %535 = vmatmul.mubr.f32.gmra.mrb[0].mxu0 %v291
    %v536 = vpop.f32.mrb[0].mxu0
    %v537 = vadd.f32 0.0, %v536
    %v538 = vpop.f32.mrb[0].mxu0
    %539 = vmatprep.mubr.f32.mxu0 %v394
    %540 = vmatmul.mubr.f32.gmra.mrb[0].mxu0 %v297
    %v541 = vpop.f32.mrb[0].mxu0
    %v542 = vadd.f32 0.0, %v541
    %v543 = vpop.f32.mrb[0].mxu0
    %544 = vmatprep.mubr.f32.mxu0 %v397
    %545 = vmatmul.mubr.f32.gmra.mrb[0].mxu0 %v303
    %v546 = vpop.f32.mrb[0].mxu0
    %v547 = vadd.f32 0.0, %v546
    %v548 = vpop.f32.mrb[0].mxu0
    %549 = vmatprep.mubr.f32.mxu0 %v400
    %550 = vmatmul.mubr.f32.gmra.mrb[0].mxu0 %v309
    %v551 = vpop.f32.mrb[0].mxu0
    %v552 = vadd.f32 0.0, %v551
    %v553 = vpop.f32.mrb[0].mxu0
    %554 = vmatprep.mubr.f32.mxu0 %v403
    %555 = vmatmul.mubr.f32.gmra.mrb[0].mxu0 %v315
    %v556 = vpop.f32.mrb[0].mxu0
    %v557 = vadd.f32 0.0, %v556
    %v558 = vpop.f32.mrb[0].mxu0
    %559 = vmatprep.mubr.f32.mxu0 %v406
    %560 = vmatmul.mubr.f32.gmra.mrb[0].mxu0 %v321
    %v561 = vpop.f32.mrb[0].mxu0
    %v562 = vadd.f32 0.0, %v561
    %v563 = vpop.f32.mrb[0].mxu0
    %564 = vmatprep.mubr.f32.mxu0 %v409
    %565 = vmatmul.mubr.f32.gmra.mrb[0].mxu0 %v327
    %v566 = vpop.f32.mrb[0].mxu0
    %v567 = vadd.f32 0.0, %v566
    %v568 = vpop.f32.mrb[0].mxu0
    %569 = vmatprep.mubr.f32.mxu0 %v412
    %570 = vmatmul.mubr.f32.gmra.mrb[0].mxu0 %v333
    %v571 = vpop.f32.mrb[0].mxu0
    %v572 = vadd.f32 0.0, %v571
    %v573 = vpop.f32.mrb[0].mxu0
    %574 = vmatprep.mubr.f32.mxu0 %v415
    %575 = vmatmul.mubr.f32.gmra.mrb[0].mxu0 %v339
    %v576 = vpop.f32.mrb[0].mxu0
    %v577 = vadd.f32 0.0, %v576
    %v578 = vpop.f32.mrb[0].mxu0
    %579 = vmatprep.mubr.f32.mxu0 %v418
    %580 = vmatmul.mubr.f32.gmra.mrb[0].mxu0 %v345
    %v581 = vpop.f32.mrb[0].mxu0
    %v582 = vadd.f32 0.0, %v581
    %v583 = vpop.f32.mrb[0].mxu0
    %584 = vmatprep.mubr.f32.mxu0 %v421
    %585 = vmatmul.mubr.f32.gmra.mrb[0].mxu0 %v351
    %v586 = vpop.f32.mrb[0].mxu0
    %v587 = vadd.f32 0.0, %v586
    %v588 = vpop.f32.mrb[0].mxu0
    %589 = vmatprep.mubr.f32.mxu0 %v424
    %590 = vmatmul.mubr.f32.gmra.mrb[0].mxu0 %v357
    %v591 = vpop.f32.mrb[0].mxu0
    %v592 = vadd.f32 0.0, %v591
    %v593 = vpop.f32.mrb[0].mxu0
    %594 = vdwg.mxu0
    %v595 = vld [vmem:[%s1] sm:$0xff]
    %v596 = vld [vmem:[%s1 + $0x8] sm:$0xff]
    %v597 = vld [vmem:[%s1 + $0x10] sm:$0xff]
    %v598 = vld [vmem:[%s1 + $0x18] sm:$0xff]
    %v599 = vld [vmem:[%s1 + $0x20] sm:$0xff]
    %v600 = vld [vmem:[%s1 + $0x28] sm:$0xff]
    %v601 = vld [vmem:[%s1 + $0x30] sm:$0xff]
    %v602 = vld [vmem:[%s1 + $0x38] sm:$0xff]
    %v603 = vld [vmem:[%s1 + $0x40] sm:$0xff]
    %v604 = vld [vmem:[%s1 + $0x48] sm:$0xff]
    %v605 = vld [vmem:[%s1 + $0x50] sm:$0xff]
    %v606 = vld [vmem:[%s1 + $0x58] sm:$0xff]
    %v607 = vld [vmem:[%s1 + $0x60] sm:$0xff]
    %v608 = vld [vmem:[%s1 + $0x68] sm:$0xff]
    %v609 = vld [vmem:[%s1 + $0x70] sm:$0xff]
    %v610 = vld [vmem:[%s1 + $0x78] sm:$0xff]
    %611 = vset.pattern.permute.xlu0 0
    %612 = vperm.xlu0 %611, %v595
    %v613 = vpop.permute.xlu0 %612
    %614 = vset.pattern.permute.xlu0 0
    %615 = vperm.xlu0 %614, %v596
    %v616 = vpop.permute.xlu0 %615
    %617 = vset.pattern.permute.xlu0 0
    %618 = vperm.xlu0 %617, %v597
    %v619 = vpop.permute.xlu0 %618
    %620 = vset.pattern.permute.xlu0 0
    %621 = vperm.xlu0 %620, %v598
    %v622 = vpop.permute.xlu0 %621
    %623 = vset.pattern.permute.xlu0 0
    %624 = vperm.xlu0 %623, %v599
    %v625 = vpop.permute.xlu0 %624
    %626 = vset.pattern.permute.xlu0 0
    %627 = vperm.xlu0 %626, %v600
    %v628 = vpop.permute.xlu0 %627
    %629 = vset.pattern.permute.xlu0 0
    %630 = vperm.xlu0 %629, %v601
    %v631 = vpop.permute.xlu0 %630
    %632 = vset.pattern.permute.xlu0 0
    %633 = vperm.xlu0 %632, %v602
    %v634 = vpop.permute.xlu0 %633
    %635 = vset.pattern.permute.xlu0 0
    %636 = vperm.xlu0 %635, %v603
    %v637 = vpop.permute.xlu0 %636
    %638 = vset.pattern.permute.xlu0 0
    %639 = vperm.xlu0 %638, %v604
    %v640 = vpop.permute.xlu0 %639
    %641 = vset.pattern.permute.xlu0 0
    %642 = vperm.xlu0 %641, %v605
    %v643 = vpop.permute.xlu0 %642
    %644 = vset.pattern.permute.xlu0 0
    %645 = vperm.xlu0 %644, %v606
    %v646 = vpop.permute.xlu0 %645
    %647 = vset.pattern.permute.xlu0 0
    %648 = vperm.xlu0 %647, %v607
    %v649 = vpop.permute.xlu0 %648
    %650 = vset.pattern.permute.xlu0 0
    %651 = vperm.xlu0 %650, %v608
    %v652 = vpop.permute.xlu0 %651
    %653 = vset.pattern.permute.xlu0 0
    %654 = vperm.xlu0 %653, %v609
    %v655 = vpop.permute.xlu0 %654
    %656 = vset.pattern.permute.xlu0 0
    %657 = vperm.xlu0 %656, %v610
    %v658 = vpop.permute.xlu0 %657
    %vm659 = vcmp.eq.s32.totalorder %v613, %v22
    %vm660 = vcmp.eq.s32.totalorder %v616, %v22
    %vm661 = vcmp.eq.s32.totalorder %v619, %v22
    %vm662 = vcmp.eq.s32.totalorder %v622, %v22
    %vm663 = vcmp.eq.s32.totalorder %v625, %v22
    %vm664 = vcmp.eq.s32.totalorder %v628, %v22
    %vm665 = vcmp.eq.s32.totalorder %v631, %v22
    %vm666 = vcmp.eq.s32.totalorder %v634, %v22
    %vm667 = vcmp.eq.s32.totalorder %v637, %v22
    %vm668 = vcmp.eq.s32.totalorder %v640, %v22
    %vm669 = vcmp.eq.s32.totalorder %v643, %v22
    %vm670 = vcmp.eq.s32.totalorder %v646, %v22
    %vm671 = vcmp.eq.s32.totalorder %v649, %v22
    %vm672 = vcmp.eq.s32.totalorder %v652, %v22
    %vm673 = vcmp.eq.s32.totalorder %v655, %v22
    %vm674 = vcmp.eq.s32.totalorder %v658, %v22
    %v675 = vsel %vm659, %v517, 0.0
    %v676 = vsel %vm660, %v522, 0.0
    %v677 = vsel %vm661, %v527, 0.0
    %v678 = vsel %vm662, %v532, 0.0
    %v679 = vsel %vm663, %v537, 0.0
    %v680 = vsel %vm664, %v542, 0.0
    %v681 = vsel %vm665, %v547, 0.0
    %v682 = vsel %vm666, %v552, 0.0
    %v683 = vsel %vm667, %v557, 0.0
    %v684 = vsel %vm668, %v562, 0.0
    %v685 = vsel %vm669, %v567, 0.0
    %v686 = vsel %vm670, %v572, 0.0
    %v687 = vsel %vm671, %v577, 0.0
    %v688 = vsel %vm672, %v582, 0.0
    %v689 = vsel %vm673, %v587, 0.0
    %v690 = vsel %vm674, %v592, 0.0
    %v691 = vsel %vm151, %v675, 0.0
    %692 = vadd.xlane.f32.xlu0 %v691
    %v693 = vpop.xlane.xlu0 %692
    %v694 = vsel %vm151, %v676, 0.0
    %695 = vadd.xlane.f32.xlu0 %v694
    %v696 = vpop.xlane.xlu0 %695
    %v697 = vsel %vm151, %v677, 0.0
    %698 = vadd.xlane.f32.xlu0 %v697
    %v699 = vpop.xlane.xlu0 %698
    %v700 = vsel %vm151, %v678, 0.0
    %701 = vadd.xlane.f32.xlu0 %v700
    %v702 = vpop.xlane.xlu0 %701
    %v703 = vsel %vm151, %v679, 0.0
    %704 = vadd.xlane.f32.xlu0 %v703
    %v705 = vpop.xlane.xlu0 %704
    %v706 = vsel %vm151, %v680, 0.0
    %707 = vadd.xlane.f32.xlu0 %v706
    %v708 = vpop.xlane.xlu0 %707
    %v709 = vsel %vm151, %v681, 0.0
    %710 = vadd.xlane.f32.xlu0 %v709
    %v711 = vpop.xlane.xlu0 %710
    %v712 = vsel %vm151, %v682, 0.0
    %713 = vadd.xlane.f32.xlu0 %v712
    %v714 = vpop.xlane.xlu0 %713
    %v715 = vsel %vm151, %v683, 0.0
    %716 = vadd.xlane.f32.xlu0 %v715
    %v717 = vpop.xlane.xlu0 %716
    %v718 = vsel %vm151, %v684, 0.0
    %719 = vadd.xlane.f32.xlu0 %v718
    %v720 = vpop.xlane.xlu0 %719
    %v721 = vsel %vm151, %v685, 0.0
    %722 = vadd.xlane.f32.xlu0 %v721
    %v723 = vpop.xlane.xlu0 %722
    %v724 = vsel %vm151, %v686, 0.0
    %725 = vadd.xlane.f32.xlu0 %v724
    %v726 = vpop.xlane.xlu0 %725
    %v727 = vsel %vm151, %v687, 0.0
    %728 = vadd.xlane.f32.xlu0 %v727
    %v729 = vpop.xlane.xlu0 %728
    %v730 = vsel %vm151, %v688, 0.0
    %731 = vadd.xlane.f32.xlu0 %v730
    %v732 = vpop.xlane.xlu0 %731
    %v733 = vsel %vm151, %v689, 0.0
    %734 = vadd.xlane.f32.xlu0 %v733
    %v735 = vpop.xlane.xlu0 %734
    %v736 = vsel %vm151, %v690, 0.0
    %737 = vadd.xlane.f32.xlu0 %v736
    %v738 = vpop.xlane.xlu0 %737
    %v739 = vmin.f32 %v693, 0.0
    %v740 = vmin.f32 %v696, 0.0
    %v741 = vmin.f32 %v699, 0.0
    %v742 = vmin.f32 %v702, 0.0
    %v743 = vmin.f32 %v705, 0.0
    %v744 = vmin.f32 %v708, 0.0
    %v745 = vmin.f32 %v711, 0.0
    %v746 = vmin.f32 %v714, 0.0
    %v747 = vmin.f32 %v717, 0.0
    %v748 = vmin.f32 %v720, 0.0
    %v749 = vmin.f32 %v723, 0.0
    %v750 = vmin.f32 %v726, 0.0
    %v751 = vmin.f32 %v729, 0.0
    %v752 = vmin.f32 %v732, 0.0
    %v753 = vmin.f32 %v735, 0.0
    %v754 = vmin.f32 %v738, 0.0
    %v755 = vand.u32 2147483647, %v693
    %v756 = vand.u32 2147483647, %v696
    %v757 = vand.u32 2147483647, %v699
    %v758 = vand.u32 2147483647, %v702
    %v759 = vand.u32 2147483647, %v705
    %v760 = vand.u32 2147483647, %v708
    %v761 = vand.u32 2147483647, %v711
    %v762 = vand.u32 2147483647, %v714
    %v763 = vand.u32 2147483647, %v717
    %v764 = vand.u32 2147483647, %v720
    %v765 = vand.u32 2147483647, %v723
    %v766 = vand.u32 2147483647, %v726
    %v767 = vand.u32 2147483647, %v729
    %v768 = vand.u32 2147483647, %v732
    %v769 = vand.u32 2147483647, %v735
    %v770 = vand.u32 2147483647, %v738
    %v771 = vsub.f32 0.0, %v755
    %v772 = vsub.f32 0.0, %v756
    %v773 = vsub.f32 0.0, %v757
    %v774 = vsub.f32 0.0, %v758
    %v775 = vsub.f32 0.0, %v759
    %v776 = vsub.f32 0.0, %v760
    %v777 = vsub.f32 0.0, %v761
    %v778 = vsub.f32 0.0, %v762
    %v779 = vsub.f32 0.0, %v763
    %v780 = vsub.f32 0.0, %v764
    %v781 = vsub.f32 0.0, %v765
    %v782 = vsub.f32 0.0, %v766
    %v783 = vsub.f32 0.0, %v767
    %v784 = vsub.f32 0.0, %v768
    %v785 = vsub.f32 0.0, %v769
    %v786 = vsub.f32 0.0, %v770
    %v787 = vmul.f32 %v771, 1.442695
    %v788 = vpow.pop %v787
    %v789 = vmul.f32 %v772, 1.442695
    %v790 = vpow.pop %v789
    %v791 = vmul.f32 %v773, 1.442695
    %v792 = vpow.pop %v791
    %v793 = vmul.f32 %v774, 1.442695
    %v794 = vpow.pop %v793
    %v795 = vmul.f32 %v775, 1.442695
    %v796 = vpow.pop %v795
    %v797 = vmul.f32 %v776, 1.442695
    %v798 = vpow.pop %v797
    %v799 = vmul.f32 %v777, 1.442695
    %v800 = vpow.pop %v799
    %v801 = vmul.f32 %v778, 1.442695
    %v802 = vpow.pop %v801
    %v803 = vmul.f32 %v779, 1.442695
    %v804 = vpow.pop %v803
    %v805 = vmul.f32 %v780, 1.442695
    %v806 = vpow.pop %v805
    %v807 = vmul.f32 %v781, 1.442695
    %v808 = vpow.pop %v807
    %v809 = vmul.f32 %v782, 1.442695
    %v810 = vpow.pop %v809
    %v811 = vmul.f32 %v783, 1.442695
    %v812 = vpow.pop %v811
    %v813 = vmul.f32 %v784, 1.442695
    %v814 = vpow.pop %v813
    %v815 = vmul.f32 %v785, 1.442695
    %v816 = vpow.pop %v815
    %v817 = vmul.f32 %v786, 1.442695
    %v818 = vpow.pop %v817
    %v819 = vadd.f32 %v788, 1.0
    %v820 = vlog2.pop %v819
    %v821 = vmul.f32 %v820, 0.6931472
    %v822 = vmul.f32 -0.5, %v788
    %v823 = vadd.f32 %v822, 1.0
    %v824 = vmul.f32 %v823, %v788
    %v825 = vand.u32 2147483647, %v788
    %vm826 = vcmp.lt.f32.partialorder %v825, 0.0004427343
    %v827 = vsel %vm826, %v824, %v821
    %v828 = vadd.f32 %v790, 1.0
    %v829 = vlog2.pop %v828
    %v830 = vmul.f32 %v829, 0.6931472
    %v831 = vmul.f32 -0.5, %v790
    %v832 = vadd.f32 %v831, 1.0
    %v833 = vmul.f32 %v832, %v790
    %v834 = vand.u32 2147483647, %v790
    %vm835 = vcmp.lt.f32.partialorder %v834, 0.0004427343
    %v836 = vsel %vm835, %v833, %v830
    %v837 = vadd.f32 %v792, 1.0
    %v838 = vlog2.pop %v837
    %v839 = vmul.f32 %v838, 0.6931472
    %v840 = vmul.f32 -0.5, %v792
    %v841 = vadd.f32 %v840, 1.0
    %v842 = vmul.f32 %v841, %v792
    %v843 = vand.u32 2147483647, %v792
    %vm844 = vcmp.lt.f32.partialorder %v843, 0.0004427343
    %v845 = vsel %vm844, %v842, %v839
    %v846 = vadd.f32 %v794, 1.0
    %v847 = vlog2.pop %v846
    %v848 = vmul.f32 %v847, 0.6931472
    %v849 = vmul.f32 -0.5, %v794
    %v850 = vadd.f32 %v849, 1.0
    %v851 = vmul.f32 %v850, %v794
    %v852 = vand.u32 2147483647, %v794
    %vm853 = vcmp.lt.f32.partialorder %v852, 0.0004427343
    %v854 = vsel %vm853, %v851, %v848
    %v855 = vadd.f32 %v796, 1.0
    %v856 = vlog2.pop %v855
    %v857 = vmul.f32 %v856, 0.6931472
    %v858 = vmul.f32 -0.5, %v796
    %v859 = vadd.f32 %v858, 1.0
    %v860 = vmul.f32 %v859, %v796
    %v861 = vand.u32 2147483647, %v796
    %vm862 = vcmp.lt.f32.partialorder %v861, 0.0004427343
    %v863 = vsel %vm862, %v860, %v857
    %v864 = vadd.f32 %v798, 1.0
    %v865 = vlog2.pop %v864
    %v866 = vmul.f32 %v865, 0.6931472
    %v867 = vmul.f32 -0.5, %v798
    %v868 = vadd.f32 %v867, 1.0
    %v869 = vmul.f32 %v868, %v798
    %v870 = vand.u32 2147483647, %v798
    %vm871 = vcmp.lt.f32.partialorder %v870, 0.0004427343
    %v872 = vsel %vm871, %v869, %v866
    %v873 = vadd.f32 %v800, 1.0
    %v874 = vlog2.pop %v873
    %v875 = vmul.f32 %v874, 0.6931472
    %v876 = vmul.f32 -0.5, %v800
    %v877 = vadd.f32 %v876, 1.0
    %v878 = vmul.f32 %v877, %v800
    %v879 = vand.u32 2147483647, %v800
    %vm880 = vcmp.lt.f32.partialorder %v879, 0.0004427343
    %v881 = vsel %vm880, %v878, %v875
    %v882 = vadd.f32 %v802, 1.0
    %v883 = vlog2.pop %v882
    %v884 = vmul.f32 %v883, 0.6931472
    %v885 = vmul.f32 -0.5, %v802
    %v886 = vadd.f32 %v885, 1.0
    %v887 = vmul.f32 %v886, %v802
    %v888 = vand.u32 2147483647, %v802
    %vm889 = vcmp.lt.f32.partialorder %v888, 0.0004427343
    %v890 = vsel %vm889, %v887, %v884
    %v891 = vadd.f32 %v804, 1.0
    %v892 = vlog2.pop %v891
    %v893 = vmul.f32 %v892, 0.6931472
    %v894 = vmul.f32 -0.5, %v804
    %v895 = vadd.f32 %v894, 1.0
    %v896 = vmul.f32 %v895, %v804
    %v897 = vand.u32 2147483647, %v804
    %vm898 = vcmp.lt.f32.partialorder %v897, 0.0004427343
    %v899 = vsel %vm898, %v896, %v893
    %v900 = vadd.f32 %v806, 1.0
    %v901 = vlog2.pop %v900
    %v902 = vmul.f32 %v901, 0.6931472
    %v903 = vmul.f32 -0.5, %v806
    %v904 = vadd.f32 %v903, 1.0
    %v905 = vmul.f32 %v904, %v806
    %v906 = vand.u32 2147483647, %v806
    %vm907 = vcmp.lt.f32.partialorder %v906, 0.0004427343
    %v908 = vsel %vm907, %v905, %v902
    %v909 = vadd.f32 %v808, 1.0
    %v910 = vlog2.pop %v909
    %v911 = vmul.f32 %v910, 0.6931472
    %v912 = vmul.f32 -0.5, %v808
    %v913 = vadd.f32 %v912, 1.0
    %v914 = vmul.f32 %v913, %v808
    %v915 = vand.u32 2147483647, %v808
    %vm916 = vcmp.lt.f32.partialorder %v915, 0.0004427343
    %v917 = vsel %vm916, %v914, %v911
    %v918 = vadd.f32 %v810, 1.0
    %v919 = vlog2.pop %v918
    %v920 = vmul.f32 %v919, 0.6931472
    %v921 = vmul.f32 -0.5, %v810
    %v922 = vadd.f32 %v921, 1.0
    %v923 = vmul.f32 %v922, %v810
    %v924 = vand.u32 2147483647, %v810
    %vm925 = vcmp.lt.f32.partialorder %v924, 0.0004427343
    %v926 = vsel %vm925, %v923, %v920
    %v927 = vadd.f32 %v812, 1.0
    %v928 = vlog2.pop %v927
    %v929 = vmul.f32 %v928, 0.6931472
    %v930 = vmul.f32 -0.5, %v812
    %v931 = vadd.f32 %v930, 1.0
    %v932 = vmul.f32 %v931, %v812
    %v933 = vand.u32 2147483647, %v812
    %vm934 = vcmp.lt.f32.partialorder %v933, 0.0004427343
    %v935 = vsel %vm934, %v932, %v929
    %v936 = vadd.f32 %v814, 1.0
    %v937 = vlog2.pop %v936
    %v938 = vmul.f32 %v937, 0.6931472
    %v939 = vmul.f32 -0.5, %v814
    %v940 = vadd.f32 %v939, 1.0
    %v941 = vmul.f32 %v940, %v814
    %v942 = vand.u32 2147483647, %v814
    %vm943 = vcmp.lt.f32.partialorder %v942, 0.0004427343
    %v944 = vsel %vm943, %v941, %v938
    %v945 = vadd.f32 %v816, 1.0
    %v946 = vlog2.pop %v945
    %v947 = vmul.f32 %v946, 0.6931472
    %v948 = vmul.f32 -0.5, %v816
    %v949 = vadd.f32 %v948, 1.0
    %v950 = vmul.f32 %v949, %v816
    %v951 = vand.u32 2147483647, %v816
    %vm952 = vcmp.lt.f32.partialorder %v951, 0.0004427343
    %v953 = vsel %vm952, %v950, %v947
    %v954 = vadd.f32 %v818, 1.0
    %v955 = vlog2.pop %v954
    %v956 = vmul.f32 %v955, 0.6931472
    %v957 = vmul.f32 -0.5, %v818
    %v958 = vadd.f32 %v957, 1.0
    %v959 = vmul.f32 %v958, %v818
    %v960 = vand.u32 2147483647, %v818
    %vm961 = vcmp.lt.f32.partialorder %v960, 0.0004427343
    %v962 = vsel %vm961, %v959, %v956
    %v963 = vsub.f32 %v739, %v827
    %v964 = vsub.f32 %v740, %v836
    %v965 = vsub.f32 %v741, %v845
    %v966 = vsub.f32 %v742, %v854
    %v967 = vsub.f32 %v743, %v863
    %v968 = vsub.f32 %v744, %v872
    %v969 = vsub.f32 %v745, %v881
    %v970 = vsub.f32 %v746, %v890
    %v971 = vsub.f32 %v747, %v899
    %v972 = vsub.f32 %v748, %v908
    %v973 = vsub.f32 %v749, %v917
    %v974 = vsub.f32 %v750, %v926
    %v975 = vsub.f32 %v751, %v935
    %v976 = vsub.f32 %v752, %v944
    %v977 = vsub.f32 %v753, %v953
    %v978 = vsub.f32 %v754, %v962
    %v979 = vld [vmem:[%s2] sm:$0xff]
    %v980 = vld [vmem:[%s2 + $0x8] sm:$0xff]
    %v981 = vld [vmem:[%s2 + $0x10] sm:$0xff]
    %v982 = vld [vmem:[%s2 + $0x18] sm:$0xff]
    %v983 = vld [vmem:[%s2 + $0x20] sm:$0xff]
    %v984 = vld [vmem:[%s2 + $0x28] sm:$0xff]
    %v985 = vld [vmem:[%s2 + $0x30] sm:$0xff]
    %v986 = vld [vmem:[%s2 + $0x38] sm:$0xff]
    %v987 = vld [vmem:[%s2 + $0x40] sm:$0xff]
    %v988 = vld [vmem:[%s2 + $0x48] sm:$0xff]
    %v989 = vld [vmem:[%s2 + $0x50] sm:$0xff]
    %v990 = vld [vmem:[%s2 + $0x58] sm:$0xff]
    %v991 = vld [vmem:[%s2 + $0x60] sm:$0xff]
    %v992 = vld [vmem:[%s2 + $0x68] sm:$0xff]
    %v993 = vld [vmem:[%s2 + $0x70] sm:$0xff]
    %v994 = vld [vmem:[%s2 + $0x78] sm:$0xff]
    %995 = vset.pattern.permute.xlu0 0
    %996 = vperm.xlu0 %995, %v979
    %v997 = vpop.permute.xlu0 %996
    %998 = vset.pattern.permute.xlu0 0
    %999 = vperm.xlu0 %998, %v980
    %v1000 = vpop.permute.xlu0 %999
    %1001 = vset.pattern.permute.xlu0 0
    %1002 = vperm.xlu0 %1001, %v981
    %v1003 = vpop.permute.xlu0 %1002
    %1004 = vset.pattern.permute.xlu0 0
    %1005 = vperm.xlu0 %1004, %v982
    %v1006 = vpop.permute.xlu0 %1005
    %1007 = vset.pattern.permute.xlu0 0
    %1008 = vperm.xlu0 %1007, %v983
    %v1009 = vpop.permute.xlu0 %1008
    %1010 = vset.pattern.permute.xlu0 0
    %1011 = vperm.xlu0 %1010, %v984
    %v1012 = vpop.permute.xlu0 %1011
    %1013 = vset.pattern.permute.xlu0 0
    %1014 = vperm.xlu0 %1013, %v985
    %v1015 = vpop.permute.xlu0 %1014
    %1016 = vset.pattern.permute.xlu0 0
    %1017 = vperm.xlu0 %1016, %v986
    %v1018 = vpop.permute.xlu0 %1017
    %1019 = vset.pattern.permute.xlu0 0
    %1020 = vperm.xlu0 %1019, %v987
    %v1021 = vpop.permute.xlu0 %1020
    %1022 = vset.pattern.permute.xlu0 0
    %1023 = vperm.xlu0 %1022, %v988
    %v1024 = vpop.permute.xlu0 %1023
    %1025 = vset.pattern.permute.xlu0 0
    %1026 = vperm.xlu0 %1025, %v989
    %v1027 = vpop.permute.xlu0 %1026
    %1028 = vset.pattern.permute.xlu0 0
    %1029 = vperm.xlu0 %1028, %v990
    %v1030 = vpop.permute.xlu0 %1029
    %1031 = vset.pattern.permute.xlu0 0
    %1032 = vperm.xlu0 %1031, %v991
    %v1033 = vpop.permute.xlu0 %1032
    %1034 = vset.pattern.permute.xlu0 0
    %1035 = vperm.xlu0 %1034, %v992
    %v1036 = vpop.permute.xlu0 %1035
    %1037 = vset.pattern.permute.xlu0 0
    %1038 = vperm.xlu0 %1037, %v993
    %v1039 = vpop.permute.xlu0 %1038
    %1040 = vset.pattern.permute.xlu0 0
    %1041 = vperm.xlu0 %1040, %v994
    %v1042 = vpop.permute.xlu0 %1041
    %vm1043 = vcmp.eq.s32.totalorder %v997, %v22
    %vm1044 = vcmp.eq.s32.totalorder %v1000, %v22
    %vm1045 = vcmp.eq.s32.totalorder %v1003, %v22
    %vm1046 = vcmp.eq.s32.totalorder %v1006, %v22
    %vm1047 = vcmp.eq.s32.totalorder %v1009, %v22
    %vm1048 = vcmp.eq.s32.totalorder %v1012, %v22
    %vm1049 = vcmp.eq.s32.totalorder %v1015, %v22
    %vm1050 = vcmp.eq.s32.totalorder %v1018, %v22
    %vm1051 = vcmp.eq.s32.totalorder %v1021, %v22
    %vm1052 = vcmp.eq.s32.totalorder %v1024, %v22
    %vm1053 = vcmp.eq.s32.totalorder %v1027, %v22
    %vm1054 = vcmp.eq.s32.totalorder %v1030, %v22
    %vm1055 = vcmp.eq.s32.totalorder %v1033, %v22
    %vm1056 = vcmp.eq.s32.totalorder %v1036, %v22
    %vm1057 = vcmp.eq.s32.totalorder %v1039, %v22
    %vm1058 = vcmp.eq.s32.totalorder %v1042, %v22
    %v1059 = vsel %vm1043, %v517, 0.0
    %v1060 = vsel %vm1044, %v522, 0.0
    %v1061 = vsel %vm1045, %v527, 0.0
    %v1062 = vsel %vm1046, %v532, 0.0
    %v1063 = vsel %vm1047, %v537, 0.0
    %v1064 = vsel %vm1048, %v542, 0.0
    %v1065 = vsel %vm1049, %v547, 0.0
    %v1066 = vsel %vm1050, %v552, 0.0
    %v1067 = vsel %vm1051, %v557, 0.0
    %v1068 = vsel %vm1052, %v562, 0.0
    %v1069 = vsel %vm1053, %v567, 0.0
    %v1070 = vsel %vm1054, %v572, 0.0
    %v1071 = vsel %vm1055, %v577, 0.0
    %v1072 = vsel %vm1056, %v582, 0.0
    %v1073 = vsel %vm1057, %v587, 0.0
    %v1074 = vsel %vm1058, %v592, 0.0
    %v1075 = vsel %vm151, %v1059, 0.0
    %1076 = vadd.xlane.f32.xlu0 %v1075
    %v1077 = vpop.xlane.xlu0 %1076
    %v1078 = vsel %vm151, %v1060, 0.0
    %1079 = vadd.xlane.f32.xlu0 %v1078
    %v1080 = vpop.xlane.xlu0 %1079
    %v1081 = vsel %vm151, %v1061, 0.0
    %1082 = vadd.xlane.f32.xlu0 %v1081
    %v1083 = vpop.xlane.xlu0 %1082
    %v1084 = vsel %vm151, %v1062, 0.0
    %1085 = vadd.xlane.f32.xlu0 %v1084
    %v1086 = vpop.xlane.xlu0 %1085
    %v1087 = vsel %vm151, %v1063, 0.0
    %1088 = vadd.xlane.f32.xlu0 %v1087
    %v1089 = vpop.xlane.xlu0 %1088
    %v1090 = vsel %vm151, %v1064, 0.0
    %1091 = vadd.xlane.f32.xlu0 %v1090
    %v1092 = vpop.xlane.xlu0 %1091
    %v1093 = vsel %vm151, %v1065, 0.0
    %1094 = vadd.xlane.f32.xlu0 %v1093
    %v1095 = vpop.xlane.xlu0 %1094
    %v1096 = vsel %vm151, %v1066, 0.0
    %1097 = vadd.xlane.f32.xlu0 %v1096
    %v1098 = vpop.xlane.xlu0 %1097
    %v1099 = vsel %vm151, %v1067, 0.0
    %1100 = vadd.xlane.f32.xlu0 %v1099
    %v1101 = vpop.xlane.xlu0 %1100
    %v1102 = vsel %vm151, %v1068, 0.0
    %1103 = vadd.xlane.f32.xlu0 %v1102
    %v1104 = vpop.xlane.xlu0 %1103
    %v1105 = vsel %vm151, %v1069, 0.0
    %1106 = vadd.xlane.f32.xlu0 %v1105
    %v1107 = vpop.xlane.xlu0 %1106
    %v1108 = vsel %vm151, %v1070, 0.0
    %1109 = vadd.xlane.f32.xlu0 %v1108
    %v1110 = vpop.xlane.xlu0 %1109
    %v1111 = vsel %vm151, %v1071, 0.0
    %1112 = vadd.xlane.f32.xlu0 %v1111
    %v1113 = vpop.xlane.xlu0 %1112
    %v1114 = vsel %vm151, %v1072, 0.0
    %1115 = vadd.xlane.f32.xlu0 %v1114
    %v1116 = vpop.xlane.xlu0 %1115
    %v1117 = vsel %vm151, %v1073, 0.0
    %1118 = vadd.xlane.f32.xlu0 %v1117
    %v1119 = vpop.xlane.xlu0 %1118
    %v1120 = vsel %vm151, %v1074, 0.0
    %1121 = vadd.xlane.f32.xlu0 %v1120
    %v1122 = vpop.xlane.xlu0 %1121
    %v1123 = vsub.f32 0.0, %v1077
    %v1124 = vsub.f32 0.0, %v1080
    %v1125 = vsub.f32 0.0, %v1083
    %v1126 = vsub.f32 0.0, %v1086
    %v1127 = vsub.f32 0.0, %v1089
    %v1128 = vsub.f32 0.0, %v1092
    %v1129 = vsub.f32 0.0, %v1095
    %v1130 = vsub.f32 0.0, %v1098
    %v1131 = vsub.f32 0.0, %v1101
    %v1132 = vsub.f32 0.0, %v1104
    %v1133 = vsub.f32 0.0, %v1107
    %v1134 = vsub.f32 0.0, %v1110
    %v1135 = vsub.f32 0.0, %v1113
    %v1136 = vsub.f32 0.0, %v1116
    %v1137 = vsub.f32 0.0, %v1119
    %v1138 = vsub.f32 0.0, %v1122
    %v1139 = vmin.f32 %v1123, 0.0
    %v1140 = vmin.f32 %v1124, 0.0
    %v1141 = vmin.f32 %v1125, 0.0
    %v1142 = vmin.f32 %v1126, 0.0
    %v1143 = vmin.f32 %v1127, 0.0
    %v1144 = vmin.f32 %v1128, 0.0
    %v1145 = vmin.f32 %v1129, 0.0
    %v1146 = vmin.f32 %v1130, 0.0
    %v1147 = vmin.f32 %v1131, 0.0
    %v1148 = vmin.f32 %v1132, 0.0
    %v1149 = vmin.f32 %v1133, 0.0
    %v1150 = vmin.f32 %v1134, 0.0
    %v1151 = vmin.f32 %v1135, 0.0
    %v1152 = vmin.f32 %v1136, 0.0
    %v1153 = vmin.f32 %v1137, 0.0
    %v1154 = vmin.f32 %v1138, 0.0
    %v1155 = vand.u32 2147483647, %v1123
    %v1156 = vand.u32 2147483647, %v1124
    %v1157 = vand.u32 2147483647, %v1125
    %v1158 = vand.u32 2147483647, %v1126
    %v1159 = vand.u32 2147483647, %v1127
    %v1160 = vand.u32 2147483647, %v1128
    %v1161 = vand.u32 2147483647, %v1129
    %v1162 = vand.u32 2147483647, %v1130
    %v1163 = vand.u32 2147483647, %v1131
    %v1164 = vand.u32 2147483647, %v1132
    %v1165 = vand.u32 2147483647, %v1133
    %v1166 = vand.u32 2147483647, %v1134
    %v1167 = vand.u32 2147483647, %v1135
    %v1168 = vand.u32 2147483647, %v1136
    %v1169 = vand.u32 2147483647, %v1137
    %v1170 = vand.u32 2147483647, %v1138
    %v1171 = vsub.f32 0.0, %v1155
    %v1172 = vsub.f32 0.0, %v1156
    %v1173 = vsub.f32 0.0, %v1157
    %v1174 = vsub.f32 0.0, %v1158
    %v1175 = vsub.f32 0.0, %v1159
    %v1176 = vsub.f32 0.0, %v1160
    %v1177 = vsub.f32 0.0, %v1161
    %v1178 = vsub.f32 0.0, %v1162
    %v1179 = vsub.f32 0.0, %v1163
    %v1180 = vsub.f32 0.0, %v1164
    %v1181 = vsub.f32 0.0, %v1165
    %v1182 = vsub.f32 0.0, %v1166
    %v1183 = vsub.f32 0.0, %v1167
    %v1184 = vsub.f32 0.0, %v1168
    %v1185 = vsub.f32 0.0, %v1169
    %v1186 = vsub.f32 0.0, %v1170
    %v1187 = vmul.f32 %v1171, 1.442695
    %v1188 = vpow.pop %v1187
    %v1189 = vmul.f32 %v1172, 1.442695
    %v1190 = vpow.pop %v1189
    %v1191 = vmul.f32 %v1173, 1.442695
    %v1192 = vpow.pop %v1191
    %v1193 = vmul.f32 %v1174, 1.442695
    %v1194 = vpow.pop %v1193
    %v1195 = vmul.f32 %v1175, 1.442695
    %v1196 = vpow.pop %v1195
    %v1197 = vmul.f32 %v1176, 1.442695
    %v1198 = vpow.pop %v1197
    %v1199 = vmul.f32 %v1177, 1.442695
    %v1200 = vpow.pop %v1199
    %v1201 = vmul.f32 %v1178, 1.442695
    %v1202 = vpow.pop %v1201
    %v1203 = vmul.f32 %v1179, 1.442695
    %v1204 = vpow.pop %v1203
    %v1205 = vmul.f32 %v1180, 1.442695
    %v1206 = vpow.pop %v1205
    %v1207 = vmul.f32 %v1181, 1.442695
    %v1208 = vpow.pop %v1207
    %v1209 = vmul.f32 %v1182, 1.442695
    %v1210 = vpow.pop %v1209
    %v1211 = vmul.f32 %v1183, 1.442695
    %v1212 = vpow.pop %v1211
    %v1213 = vmul.f32 %v1184, 1.442695
    %v1214 = vpow.pop %v1213
    %v1215 = vmul.f32 %v1185, 1.442695
    %v1216 = vpow.pop %v1215
    %v1217 = vmul.f32 %v1186, 1.442695
    %v1218 = vpow.pop %v1217
    %v1219 = vadd.f32 %v1188, 1.0
    %v1220 = vlog2.pop %v1219
    %v1221 = vmul.f32 %v1220, 0.6931472
    %v1222 = vmul.f32 -0.5, %v1188
    %v1223 = vadd.f32 %v1222, 1.0
    %v1224 = vmul.f32 %v1223, %v1188
    %v1225 = vand.u32 2147483647, %v1188
    %vm1226 = vcmp.lt.f32.partialorder %v1225, 0.0004427343
    %v1227 = vsel %vm1226, %v1224, %v1221
    %v1228 = vadd.f32 %v1190, 1.0
    %v1229 = vlog2.pop %v1228
    %v1230 = vmul.f32 %v1229, 0.6931472
    %v1231 = vmul.f32 -0.5, %v1190
    %v1232 = vadd.f32 %v1231, 1.0
    %v1233 = vmul.f32 %v1232, %v1190
    %v1234 = vand.u32 2147483647, %v1190
    %vm1235 = vcmp.lt.f32.partialorder %v1234, 0.0004427343
    %v1236 = vsel %vm1235, %v1233, %v1230
    %v1237 = vadd.f32 %v1192, 1.0
    %v1238 = vlog2.pop %v1237
    %v1239 = vmul.f32 %v1238, 0.6931472
    %v1240 = vmul.f32 -0.5, %v1192
    %v1241 = vadd.f32 %v1240, 1.0
    %v1242 = vmul.f32 %v1241, %v1192
    %v1243 = vand.u32 2147483647, %v1192
    %vm1244 = vcmp.lt.f32.partialorder %v1243, 0.0004427343
    %v1245 = vsel %vm1244, %v1242, %v1239
    %v1246 = vadd.f32 %v1194, 1.0
    %v1247 = vlog2.pop %v1246
    %v1248 = vmul.f32 %v1247, 0.6931472
    %v1249 = vmul.f32 -0.5, %v1194
    %v1250 = vadd.f32 %v1249, 1.0
    %v1251 = vmul.f32 %v1250, %v1194
    %v1252 = vand.u32 2147483647, %v1194
    %vm1253 = vcmp.lt.f32.partialorder %v1252, 0.0004427343
    %v1254 = vsel %vm1253, %v1251, %v1248
    %v1255 = vadd.f32 %v1196, 1.0
    %v1256 = vlog2.pop %v1255
    %v1257 = vmul.f32 %v1256, 0.6931472
    %v1258 = vmul.f32 -0.5, %v1196
    %v1259 = vadd.f32 %v1258, 1.0
    %v1260 = vmul.f32 %v1259, %v1196
    %v1261 = vand.u32 2147483647, %v1196
    %vm1262 = vcmp.lt.f32.partialorder %v1261, 0.0004427343
    %v1263 = vsel %vm1262, %v1260, %v1257
    %v1264 = vadd.f32 %v1198, 1.0
    %v1265 = vlog2.pop %v1264
    %v1266 = vmul.f32 %v1265, 0.6931472
    %v1267 = vmul.f32 -0.5, %v1198
    %v1268 = vadd.f32 %v1267, 1.0
    %v1269 = vmul.f32 %v1268, %v1198
    %v1270 = vand.u32 2147483647, %v1198
    %vm1271 = vcmp.lt.f32.partialorder %v1270, 0.0004427343
    %v1272 = vsel %vm1271, %v1269, %v1266
    %v1273 = vadd.f32 %v1200, 1.0
    %v1274 = vlog2.pop %v1273
    %v1275 = vmul.f32 %v1274, 0.6931472
    %v1276 = vmul.f32 -0.5, %v1200
    %v1277 = vadd.f32 %v1276, 1.0
    %v1278 = vmul.f32 %v1277, %v1200
    %v1279 = vand.u32 2147483647, %v1200
    %vm1280 = vcmp.lt.f32.partialorder %v1279, 0.0004427343
    %v1281 = vsel %vm1280, %v1278, %v1275
    %v1282 = vadd.f32 %v1202, 1.0
    %v1283 = vlog2.pop %v1282
    %v1284 = vmul.f32 %v1283, 0.6931472
    %v1285 = vmul.f32 -0.5, %v1202
    %v1286 = vadd.f32 %v1285, 1.0
    %v1287 = vmul.f32 %v1286, %v1202
    %v1288 = vand.u32 2147483647, %v1202
    %vm1289 = vcmp.lt.f32.partialorder %v1288, 0.0004427343
    %v1290 = vsel %vm1289, %v1287, %v1284
    %v1291 = vadd.f32 %v1204, 1.0
    %v1292 = vlog2.pop %v1291
    %v1293 = vmul.f32 %v1292, 0.6931472
    %v1294 = vmul.f32 -0.5, %v1204
    %v1295 = vadd.f32 %v1294, 1.0
    %v1296 = vmul.f32 %v1295, %v1204
    %v1297 = vand.u32 2147483647, %v1204
    %vm1298 = vcmp.lt.f32.partialorder %v1297, 0.0004427343
    %v1299 = vsel %vm1298, %v1296, %v1293
    %v1300 = vadd.f32 %v1206, 1.0
    %v1301 = vlog2.pop %v1300
    %v1302 = vmul.f32 %v1301, 0.6931472
    %v1303 = vmul.f32 -0.5, %v1206
    %v1304 = vadd.f32 %v1303, 1.0
    %v1305 = vmul.f32 %v1304, %v1206
    %v1306 = vand.u32 2147483647, %v1206
    %vm1307 = vcmp.lt.f32.partialorder %v1306, 0.0004427343
    %v1308 = vsel %vm1307, %v1305, %v1302
    %v1309 = vadd.f32 %v1208, 1.0
    %v1310 = vlog2.pop %v1309
    %v1311 = vmul.f32 %v1310, 0.6931472
    %v1312 = vmul.f32 -0.5, %v1208
    %v1313 = vadd.f32 %v1312, 1.0
    %v1314 = vmul.f32 %v1313, %v1208
    %v1315 = vand.u32 2147483647, %v1208
    %vm1316 = vcmp.lt.f32.partialorder %v1315, 0.0004427343
    %v1317 = vsel %vm1316, %v1314, %v1311
    %v1318 = vadd.f32 %v1210, 1.0
    %v1319 = vlog2.pop %v1318
    %v1320 = vmul.f32 %v1319, 0.6931472
    %v1321 = vmul.f32 -0.5, %v1210
    %v1322 = vadd.f32 %v1321, 1.0
    %v1323 = vmul.f32 %v1322, %v1210
    %v1324 = vand.u32 2147483647, %v1210
    %vm1325 = vcmp.lt.f32.partialorder %v1324, 0.0004427343
    %v1326 = vsel %vm1325, %v1323, %v1320
    %v1327 = vadd.f32 %v1212, 1.0
    %v1328 = vlog2.pop %v1327
    %v1329 = vmul.f32 %v1328, 0.6931472
    %v1330 = vmul.f32 -0.5, %v1212
    %v1331 = vadd.f32 %v1330, 1.0
    %v1332 = vmul.f32 %v1331, %v1212
    %v1333 = vand.u32 2147483647, %v1212
    %vm1334 = vcmp.lt.f32.partialorder %v1333, 0.0004427343
    %v1335 = vsel %vm1334, %v1332, %v1329
    %v1336 = vadd.f32 %v1214, 1.0
    %v1337 = vlog2.pop %v1336
    %v1338 = vmul.f32 %v1337, 0.6931472
    %v1339 = vmul.f32 -0.5, %v1214
    %v1340 = vadd.f32 %v1339, 1.0
    %v1341 = vmul.f32 %v1340, %v1214
    %v1342 = vand.u32 2147483647, %v1214
    %vm1343 = vcmp.lt.f32.partialorder %v1342, 0.0004427343
    %v1344 = vsel %vm1343, %v1341, %v1338
    %v1345 = vadd.f32 %v1216, 1.0
    %v1346 = vlog2.pop %v1345
    %v1347 = vmul.f32 %v1346, 0.6931472
    %v1348 = vmul.f32 -0.5, %v1216
    %v1349 = vadd.f32 %v1348, 1.0
    %v1350 = vmul.f32 %v1349, %v1216
    %v1351 = vand.u32 2147483647, %v1216
    %vm1352 = vcmp.lt.f32.partialorder %v1351, 0.0004427343
    %v1353 = vsel %vm1352, %v1350, %v1347
    %v1354 = vadd.f32 %v1218, 1.0
    %v1355 = vlog2.pop %v1354
    %v1356 = vmul.f32 %v1355, 0.6931472
    %v1357 = vmul.f32 -0.5, %v1218
    %v1358 = vadd.f32 %v1357, 1.0
    %v1359 = vmul.f32 %v1358, %v1218
    %v1360 = vand.u32 2147483647, %v1218
    %vm1361 = vcmp.lt.f32.partialorder %v1360, 0.0004427343
    %v1362 = vsel %vm1361, %v1359, %v1356
    %v1363 = vsub.f32 %v1139, %v1227
    %v1364 = vsub.f32 %v1140, %v1236
    %v1365 = vsub.f32 %v1141, %v1245
    %v1366 = vsub.f32 %v1142, %v1254
    %v1367 = vsub.f32 %v1143, %v1263
    %v1368 = vsub.f32 %v1144, %v1272
    %v1369 = vsub.f32 %v1145, %v1281
    %v1370 = vsub.f32 %v1146, %v1290
    %v1371 = vsub.f32 %v1147, %v1299
    %v1372 = vsub.f32 %v1148, %v1308
    %v1373 = vsub.f32 %v1149, %v1317
    %v1374 = vsub.f32 %v1150, %v1326
    %v1375 = vsub.f32 %v1151, %v1335
    %v1376 = vsub.f32 %v1152, %v1344
    %v1377 = vsub.f32 %v1153, %v1353
    %v1378 = vsub.f32 %v1154, %v1362
    %v1379 = vadd.f32 %v1363, 0.0
    %v1380 = vadd.f32 %v1364, 0.0
    %v1381 = vadd.f32 %v1365, 0.0
    %v1382 = vadd.f32 %v1366, 0.0
    %v1383 = vadd.f32 %v1367, 0.0
    %v1384 = vadd.f32 %v1368, 0.0
    %v1385 = vadd.f32 %v1369, 0.0
    %v1386 = vadd.f32 %v1370, 0.0
    %v1387 = vadd.f32 %v1371, 0.0
    %v1388 = vadd.f32 %v1372, 0.0
    %v1389 = vadd.f32 %v1373, 0.0
    %v1390 = vadd.f32 %v1374, 0.0
    %v1391 = vadd.f32 %v1375, 0.0
    %v1392 = vadd.f32 %v1376, 0.0
    %v1393 = vadd.f32 %v1377, 0.0
    %v1394 = vadd.f32 %v1378, 0.0
    %s1395 = scalar_lea.vmem %s2, 128
    %v1396 = vld [vmem:[%s1395] sm:$0xff]
    %v1397 = vld [vmem:[%s1395 + $0x8] sm:$0xff]
    %v1398 = vld [vmem:[%s1395 + $0x10] sm:$0xff]
    %v1399 = vld [vmem:[%s1395 + $0x18] sm:$0xff]
    %v1400 = vld [vmem:[%s1395 + $0x20] sm:$0xff]
    %v1401 = vld [vmem:[%s1395 + $0x28] sm:$0xff]
    %v1402 = vld [vmem:[%s1395 + $0x30] sm:$0xff]
    %v1403 = vld [vmem:[%s1395 + $0x38] sm:$0xff]
    %v1404 = vld [vmem:[%s1395 + $0x40] sm:$0xff]
    %v1405 = vld [vmem:[%s1395 + $0x48] sm:$0xff]
    %v1406 = vld [vmem:[%s1395 + $0x50] sm:$0xff]
    %v1407 = vld [vmem:[%s1395 + $0x58] sm:$0xff]
    %v1408 = vld [vmem:[%s1395 + $0x60] sm:$0xff]
    %v1409 = vld [vmem:[%s1395 + $0x68] sm:$0xff]
    %v1410 = vld [vmem:[%s1395 + $0x70] sm:$0xff]
    %v1411 = vld [vmem:[%s1395 + $0x78] sm:$0xff]
    %1412 = vset.pattern.permute.xlu0 0
    %1413 = vperm.xlu0 %1412, %v1396
    %v1414 = vpop.permute.xlu0 %1413
    %1415 = vset.pattern.permute.xlu0 0
    %1416 = vperm.xlu0 %1415, %v1397
    %v1417 = vpop.permute.xlu0 %1416
    %1418 = vset.pattern.permute.xlu0 0
    %1419 = vperm.xlu0 %1418, %v1398
    %v1420 = vpop.permute.xlu0 %1419
    %1421 = vset.pattern.permute.xlu0 0
    %1422 = vperm.xlu0 %1421, %v1399
    %v1423 = vpop.permute.xlu0 %1422
    %1424 = vset.pattern.permute.xlu0 0
    %1425 = vperm.xlu0 %1424, %v1400
    %v1426 = vpop.permute.xlu0 %1425
    %1427 = vset.pattern.permute.xlu0 0
    %1428 = vperm.xlu0 %1427, %v1401
    %v1429 = vpop.permute.xlu0 %1428
    %1430 = vset.pattern.permute.xlu0 0
    %1431 = vperm.xlu0 %1430, %v1402
    %v1432 = vpop.permute.xlu0 %1431
    %1433 = vset.pattern.permute.xlu0 0
    %1434 = vperm.xlu0 %1433, %v1403
    %v1435 = vpop.permute.xlu0 %1434
    %1436 = vset.pattern.permute.xlu0 0
    %1437 = vperm.xlu0 %1436, %v1404
    %v1438 = vpop.permute.xlu0 %1437
    %1439 = vset.pattern.permute.xlu0 0
    %1440 = vperm.xlu0 %1439, %v1405
    %v1441 = vpop.permute.xlu0 %1440
    %1442 = vset.pattern.permute.xlu0 0
    %1443 = vperm.xlu0 %1442, %v1406
    %v1444 = vpop.permute.xlu0 %1443
    %1445 = vset.pattern.permute.xlu0 0
    %1446 = vperm.xlu0 %1445, %v1407
    %v1447 = vpop.permute.xlu0 %1446
    %1448 = vset.pattern.permute.xlu0 0
    %1449 = vperm.xlu0 %1448, %v1408
    %v1450 = vpop.permute.xlu0 %1449
    %1451 = vset.pattern.permute.xlu0 0
    %1452 = vperm.xlu0 %1451, %v1409
    %v1453 = vpop.permute.xlu0 %1452
    %1454 = vset.pattern.permute.xlu0 0
    %1455 = vperm.xlu0 %1454, %v1410
    %v1456 = vpop.permute.xlu0 %1455
    %1457 = vset.pattern.permute.xlu0 0
    %1458 = vperm.xlu0 %1457, %v1411
    %v1459 = vpop.permute.xlu0 %1458
    %vm1460 = vcmp.eq.s32.totalorder %v1414, %v22
    %vm1461 = vcmp.eq.s32.totalorder %v1417, %v22
    %vm1462 = vcmp.eq.s32.totalorder %v1420, %v22
    %vm1463 = vcmp.eq.s32.totalorder %v1423, %v22
    %vm1464 = vcmp.eq.s32.totalorder %v1426, %v22
    %vm1465 = vcmp.eq.s32.totalorder %v1429, %v22
    %vm1466 = vcmp.eq.s32.totalorder %v1432, %v22
    %vm1467 = vcmp.eq.s32.totalorder %v1435, %v22
    %vm1468 = vcmp.eq.s32.totalorder %v1438, %v22
    %vm1469 = vcmp.eq.s32.totalorder %v1441, %v22
    %vm1470 = vcmp.eq.s32.totalorder %v1444, %v22
    %vm1471 = vcmp.eq.s32.totalorder %v1447, %v22
    %vm1472 = vcmp.eq.s32.totalorder %v1450, %v22
    %vm1473 = vcmp.eq.s32.totalorder %v1453, %v22
    %vm1474 = vcmp.eq.s32.totalorder %v1456, %v22
    %vm1475 = vcmp.eq.s32.totalorder %v1459, %v22
    %v1476 = vsel %vm1460, %v517, 0.0
    %v1477 = vsel %vm1461, %v522, 0.0
    %v1478 = vsel %vm1462, %v527, 0.0
    %v1479 = vsel %vm1463, %v532, 0.0
    %v1480 = vsel %vm1464, %v537, 0.0
    %v1481 = vsel %vm1465, %v542, 0.0
    %v1482 = vsel %vm1466, %v547, 0.0
    %v1483 = vsel %vm1467, %v552, 0.0
    %v1484 = vsel %vm1468, %v557, 0.0
    %v1485 = vsel %vm1469, %v562, 0.0
    %v1486 = vsel %vm1470, %v567, 0.0
    %v1487 = vsel %vm1471, %v572, 0.0
    %v1488 = vsel %vm1472, %v577, 0.0
    %v1489 = vsel %vm1473, %v582, 0.0
    %v1490 = vsel %vm1474, %v587, 0.0
    %v1491 = vsel %vm1475, %v592, 0.0
    %v1492 = vsel %vm151, %v1476, 0.0
    %1493 = vadd.xlane.f32.xlu0 %v1492
    %v1494 = vpop.xlane.xlu0 %1493
    %v1495 = vsel %vm151, %v1477, 0.0
    %1496 = vadd.xlane.f32.xlu0 %v1495
    %v1497 = vpop.xlane.xlu0 %1496
    %v1498 = vsel %vm151, %v1478, 0.0
    %1499 = vadd.xlane.f32.xlu0 %v1498
    %v1500 = vpop.xlane.xlu0 %1499
    %v1501 = vsel %vm151, %v1479, 0.0
    %1502 = vadd.xlane.f32.xlu0 %v1501
    %v1503 = vpop.xlane.xlu0 %1502
    %v1504 = vsel %vm151, %v1480, 0.0
    %1505 = vadd.xlane.f32.xlu0 %v1504
    %v1506 = vpop.xlane.xlu0 %1505
    %v1507 = vsel %vm151, %v1481, 0.0
    %1508 = vadd.xlane.f32.xlu0 %v1507
    %v1509 = vpop.xlane.xlu0 %1508
    %v1510 = vsel %vm151, %v1482, 0.0
    %1511 = vadd.xlane.f32.xlu0 %v1510
    %v1512 = vpop.xlane.xlu0 %1511
    %v1513 = vsel %vm151, %v1483, 0.0
    %1514 = vadd.xlane.f32.xlu0 %v1513
    %v1515 = vpop.xlane.xlu0 %1514
    %v1516 = vsel %vm151, %v1484, 0.0
    %1517 = vadd.xlane.f32.xlu0 %v1516
    %v1518 = vpop.xlane.xlu0 %1517
    %v1519 = vsel %vm151, %v1485, 0.0
    %1520 = vadd.xlane.f32.xlu0 %v1519
    %v1521 = vpop.xlane.xlu0 %1520
    %v1522 = vsel %vm151, %v1486, 0.0
    %1523 = vadd.xlane.f32.xlu0 %v1522
    %v1524 = vpop.xlane.xlu0 %1523
    %v1525 = vsel %vm151, %v1487, 0.0
    %1526 = vadd.xlane.f32.xlu0 %v1525
    %v1527 = vpop.xlane.xlu0 %1526
    %v1528 = vsel %vm151, %v1488, 0.0
    %1529 = vadd.xlane.f32.xlu0 %v1528
    %v1530 = vpop.xlane.xlu0 %1529
    %v1531 = vsel %vm151, %v1489, 0.0
    %1532 = vadd.xlane.f32.xlu0 %v1531
    %v1533 = vpop.xlane.xlu0 %1532
    %v1534 = vsel %vm151, %v1490, 0.0
    %1535 = vadd.xlane.f32.xlu0 %v1534
    %v1536 = vpop.xlane.xlu0 %1535
    %v1537 = vsel %vm151, %v1491, 0.0
    %1538 = vadd.xlane.f32.xlu0 %v1537
    %v1539 = vpop.xlane.xlu0 %1538
    %v1540 = vsub.f32 0.0, %v1494
    %v1541 = vsub.f32 0.0, %v1497
    %v1542 = vsub.f32 0.0, %v1500
    %v1543 = vsub.f32 0.0, %v1503
    %v1544 = vsub.f32 0.0, %v1506
    %v1545 = vsub.f32 0.0, %v1509
    %v1546 = vsub.f32 0.0, %v1512
    %v1547 = vsub.f32 0.0, %v1515
    %v1548 = vsub.f32 0.0, %v1518
    %v1549 = vsub.f32 0.0, %v1521
    %v1550 = vsub.f32 0.0, %v1524
    %v1551 = vsub.f32 0.0, %v1527
    %v1552 = vsub.f32 0.0, %v1530
    %v1553 = vsub.f32 0.0, %v1533
    %v1554 = vsub.f32 0.0, %v1536
    %v1555 = vsub.f32 0.0, %v1539
    %v1556 = vmin.f32 %v1540, 0.0
    %v1557 = vmin.f32 %v1541, 0.0
    %v1558 = vmin.f32 %v1542, 0.0
    %v1559 = vmin.f32 %v1543, 0.0
    %v1560 = vmin.f32 %v1544, 0.0
    %v1561 = vmin.f32 %v1545, 0.0
    %v1562 = vmin.f32 %v1546, 0.0
    %v1563 = vmin.f32 %v1547, 0.0
    %v1564 = vmin.f32 %v1548, 0.0
    %v1565 = vmin.f32 %v1549, 0.0
    %v1566 = vmin.f32 %v1550, 0.0
    %v1567 = vmin.f32 %v1551, 0.0
    %v1568 = vmin.f32 %v1552, 0.0
    %v1569 = vmin.f32 %v1553, 0.0
    %v1570 = vmin.f32 %v1554, 0.0
    %v1571 = vmin.f32 %v1555, 0.0
    %v1572 = vand.u32 2147483647, %v1540
    %v1573 = vand.u32 2147483647, %v1541
    %v1574 = vand.u32 2147483647, %v1542
    %v1575 = vand.u32 2147483647, %v1543
    %v1576 = vand.u32 2147483647, %v1544
    %v1577 = vand.u32 2147483647, %v1545
    %v1578 = vand.u32 2147483647, %v1546
    %v1579 = vand.u32 2147483647, %v1547
    %v1580 = vand.u32 2147483647, %v1548
    %v1581 = vand.u32 2147483647, %v1549
    %v1582 = vand.u32 2147483647, %v1550
    %v1583 = vand.u32 2147483647, %v1551
    %v1584 = vand.u32 2147483647, %v1552
    %v1585 = vand.u32 2147483647, %v1553
    %v1586 = vand.u32 2147483647, %v1554
    %v1587 = vand.u32 2147483647, %v1555
    %v1588 = vsub.f32 0.0, %v1572
    %v1589 = vsub.f32 0.0, %v1573
    %v1590 = vsub.f32 0.0, %v1574
    %v1591 = vsub.f32 0.0, %v1575
    %v1592 = vsub.f32 0.0, %v1576
    %v1593 = vsub.f32 0.0, %v1577
    %v1594 = vsub.f32 0.0, %v1578
    %v1595 = vsub.f32 0.0, %v1579
    %v1596 = vsub.f32 0.0, %v1580
    %v1597 = vsub.f32 0.0, %v1581
    %v1598 = vsub.f32 0.0, %v1582
    %v1599 = vsub.f32 0.0, %v1583
    %v1600 = vsub.f32 0.0, %v1584
    %v1601 = vsub.f32 0.0, %v1585
    %v1602 = vsub.f32 0.0, %v1586
    %v1603 = vsub.f32 0.0, %v1587
    %v1604 = vmul.f32 %v1588, 1.442695
    %v1605 = vpow.pop %v1604
    %v1606 = vmul.f32 %v1589, 1.442695
    %v1607 = vpow.pop %v1606
    %v1608 = vmul.f32 %v1590, 1.442695
    %v1609 = vpow.pop %v1608
    %v1610 = vmul.f32 %v1591, 1.442695
    %v1611 = vpow.pop %v1610
    %v1612 = vmul.f32 %v1592, 1.442695
    %v1613 = vpow.pop %v1612
    %v1614 = vmul.f32 %v1593, 1.442695
    %v1615 = vpow.pop %v1614
    %v1616 = vmul.f32 %v1594, 1.442695
    %v1617 = vpow.pop %v1616
    %v1618 = vmul.f32 %v1595, 1.442695
    %v1619 = vpow.pop %v1618
    %v1620 = vmul.f32 %v1596, 1.442695
    %v1621 = vpow.pop %v1620
    %v1622 = vmul.f32 %v1597, 1.442695
    %v1623 = vpow.pop %v1622
    %v1624 = vmul.f32 %v1598, 1.442695
    %v1625 = vpow.pop %v1624
    %v1626 = vmul.f32 %v1599, 1.442695
    %v1627 = vpow.pop %v1626
    %v1628 = vmul.f32 %v1600, 1.442695
    %v1629 = vpow.pop %v1628
    %v1630 = vmul.f32 %v1601, 1.442695
    %v1631 = vpow.pop %v1630
    %v1632 = vmul.f32 %v1602, 1.442695
    %v1633 = vpow.pop %v1632
    %v1634 = vmul.f32 %v1603, 1.442695
    %v1635 = vpow.pop %v1634
    %v1636 = vadd.f32 %v1605, 1.0
    %v1637 = vlog2.pop %v1636
    %v1638 = vmul.f32 %v1637, 0.6931472
    %v1639 = vmul.f32 -0.5, %v1605
    %v1640 = vadd.f32 %v1639, 1.0
    %v1641 = vmul.f32 %v1640, %v1605
    %v1642 = vand.u32 2147483647, %v1605
    %vm1643 = vcmp.lt.f32.partialorder %v1642, 0.0004427343
    %v1644 = vsel %vm1643, %v1641, %v1638
    %v1645 = vadd.f32 %v1607, 1.0
    %v1646 = vlog2.pop %v1645
    %v1647 = vmul.f32 %v1646, 0.6931472
    %v1648 = vmul.f32 -0.5, %v1607
    %v1649 = vadd.f32 %v1648, 1.0
    %v1650 = vmul.f32 %v1649, %v1607
    %v1651 = vand.u32 2147483647, %v1607
    %vm1652 = vcmp.lt.f32.partialorder %v1651, 0.0004427343
    %v1653 = vsel %vm1652, %v1650, %v1647
    %v1654 = vadd.f32 %v1609, 1.0
    %v1655 = vlog2.pop %v1654
    %v1656 = vmul.f32 %v1655, 0.6931472
    %v1657 = vmul.f32 -0.5, %v1609
    %v1658 = vadd.f32 %v1657, 1.0
    %v1659 = vmul.f32 %v1658, %v1609
    %v1660 = vand.u32 2147483647, %v1609
    %vm1661 = vcmp.lt.f32.partialorder %v1660, 0.0004427343
    %v1662 = vsel %vm1661, %v1659, %v1656
    %v1663 = vadd.f32 %v1611, 1.0
    %v1664 = vlog2.pop %v1663
    %v1665 = vmul.f32 %v1664, 0.6931472
    %v1666 = vmul.f32 -0.5, %v1611
    %v1667 = vadd.f32 %v1666, 1.0
    %v1668 = vmul.f32 %v1667, %v1611
    %v1669 = vand.u32 2147483647, %v1611
    %vm1670 = vcmp.lt.f32.partialorder %v1669, 0.0004427343
    %v1671 = vsel %vm1670, %v1668, %v1665
    %v1672 = vadd.f32 %v1613, 1.0
    %v1673 = vlog2.pop %v1672
    %v1674 = vmul.f32 %v1673, 0.6931472
    %v1675 = vmul.f32 -0.5, %v1613
    %v1676 = vadd.f32 %v1675, 1.0
    %v1677 = vmul.f32 %v1676, %v1613
    %v1678 = vand.u32 2147483647, %v1613
    %vm1679 = vcmp.lt.f32.partialorder %v1678, 0.0004427343
    %v1680 = vsel %vm1679, %v1677, %v1674
    %v1681 = vadd.f32 %v1615, 1.0
    %v1682 = vlog2.pop %v1681
    %v1683 = vmul.f32 %v1682, 0.6931472
    %v1684 = vmul.f32 -0.5, %v1615
    %v1685 = vadd.f32 %v1684, 1.0
    %v1686 = vmul.f32 %v1685, %v1615
    %v1687 = vand.u32 2147483647, %v1615
    %vm1688 = vcmp.lt.f32.partialorder %v1687, 0.0004427343
    %v1689 = vsel %vm1688, %v1686, %v1683
    %v1690 = vadd.f32 %v1617, 1.0
    %v1691 = vlog2.pop %v1690
    %v1692 = vmul.f32 %v1691, 0.6931472
    %v1693 = vmul.f32 -0.5, %v1617
    %v1694 = vadd.f32 %v1693, 1.0
    %v1695 = vmul.f32 %v1694, %v1617
    %v1696 = vand.u32 2147483647, %v1617
    %vm1697 = vcmp.lt.f32.partialorder %v1696, 0.0004427343
    %v1698 = vsel %vm1697, %v1695, %v1692
    %v1699 = vadd.f32 %v1619, 1.0
    %v1700 = vlog2.pop %v1699
    %v1701 = vmul.f32 %v1700, 0.6931472
    %v1702 = vmul.f32 -0.5, %v1619
    %v1703 = vadd.f32 %v1702, 1.0
    %v1704 = vmul.f32 %v1703, %v1619
    %v1705 = vand.u32 2147483647, %v1619
    %vm1706 = vcmp.lt.f32.partialorder %v1705, 0.0004427343
    %v1707 = vsel %vm1706, %v1704, %v1701
    %v1708 = vadd.f32 %v1621, 1.0
    %v1709 = vlog2.pop %v1708
    %v1710 = vmul.f32 %v1709, 0.6931472
    %v1711 = vmul.f32 -0.5, %v1621
    %v1712 = vadd.f32 %v1711, 1.0
    %v1713 = vmul.f32 %v1712, %v1621
    %v1714 = vand.u32 2147483647, %v1621
    %vm1715 = vcmp.lt.f32.partialorder %v1714, 0.0004427343
    %v1716 = vsel %vm1715, %v1713, %v1710
    %v1717 = vadd.f32 %v1623, 1.0
    %v1718 = vlog2.pop %v1717
    %v1719 = vmul.f32 %v1718, 0.6931472
    %v1720 = vmul.f32 -0.5, %v1623
    %v1721 = vadd.f32 %v1720, 1.0
    %v1722 = vmul.f32 %v1721, %v1623
    %v1723 = vand.u32 2147483647, %v1623
    %vm1724 = vcmp.lt.f32.partialorder %v1723, 0.0004427343
    %v1725 = vsel %vm1724, %v1722, %v1719
    %v1726 = vadd.f32 %v1625, 1.0
    %v1727 = vlog2.pop %v1726
    %v1728 = vmul.f32 %v1727, 0.6931472
    %v1729 = vmul.f32 -0.5, %v1625
    %v1730 = vadd.f32 %v1729, 1.0
    %v1731 = vmul.f32 %v1730, %v1625
    %v1732 = vand.u32 2147483647, %v1625
    %vm1733 = vcmp.lt.f32.partialorder %v1732, 0.0004427343
    %v1734 = vsel %vm1733, %v1731, %v1728
    %v1735 = vadd.f32 %v1627, 1.0
    %v1736 = vlog2.pop %v1735
    %v1737 = vmul.f32 %v1736, 0.6931472
    %v1738 = vmul.f32 -0.5, %v1627
    %v1739 = vadd.f32 %v1738, 1.0
    %v1740 = vmul.f32 %v1739, %v1627
    %v1741 = vand.u32 2147483647, %v1627
    %vm1742 = vcmp.lt.f32.partialorder %v1741, 0.0004427343
    %v1743 = vsel %vm1742, %v1740, %v1737
    %v1744 = vadd.f32 %v1629, 1.0
    %v1745 = vlog2.pop %v1744
    %v1746 = vmul.f32 %v1745, 0.6931472
    %v1747 = vmul.f32 -0.5, %v1629
    %v1748 = vadd.f32 %v1747, 1.0
    %v1749 = vmul.f32 %v1748, %v1629
    %v1750 = vand.u32 2147483647, %v1629
    %vm1751 = vcmp.lt.f32.partialorder %v1750, 0.0004427343
    %v1752 = vsel %vm1751, %v1749, %v1746
    %v1753 = vadd.f32 %v1631, 1.0
    %v1754 = vlog2.pop %v1753
    %v1755 = vmul.f32 %v1754, 0.6931472
    %v1756 = vmul.f32 -0.5, %v1631
    %v1757 = vadd.f32 %v1756, 1.0
    %v1758 = vmul.f32 %v1757, %v1631
    %v1759 = vand.u32 2147483647, %v1631
    %vm1760 = vcmp.lt.f32.partialorder %v1759, 0.0004427343
    %v1761 = vsel %vm1760, %v1758, %v1755
    %v1762 = vadd.f32 %v1633, 1.0
    %v1763 = vlog2.pop %v1762
    %v1764 = vmul.f32 %v1763, 0.6931472
    %v1765 = vmul.f32 -0.5, %v1633
    %v1766 = vadd.f32 %v1765, 1.0
    %v1767 = vmul.f32 %v1766, %v1633
    %v1768 = vand.u32 2147483647, %v1633
    %vm1769 = vcmp.lt.f32.partialorder %v1768, 0.0004427343
    %v1770 = vsel %vm1769, %v1767, %v1764
    %v1771 = vadd.f32 %v1635, 1.0
    %v1772 = vlog2.pop %v1771
    %v1773 = vmul.f32 %v1772, 0.6931472
    %v1774 = vmul.f32 -0.5, %v1635
    %v1775 = vadd.f32 %v1774, 1.0
    %v1776 = vmul.f32 %v1775, %v1635
    %v1777 = vand.u32 2147483647, %v1635
    %vm1778 = vcmp.lt.f32.partialorder %v1777, 0.0004427343
    %v1779 = vsel %vm1778, %v1776, %v1773
    %v1780 = vsub.f32 %v1556, %v1644
    %v1781 = vsub.f32 %v1557, %v1653
    %v1782 = vsub.f32 %v1558, %v1662
    %v1783 = vsub.f32 %v1559, %v1671
    %v1784 = vsub.f32 %v1560, %v1680
    %v1785 = vsub.f32 %v1561, %v1689
    %v1786 = vsub.f32 %v1562, %v1698
    %v1787 = vsub.f32 %v1563, %v1707
    %v1788 = vsub.f32 %v1564, %v1716
    %v1789 = vsub.f32 %v1565, %v1725
    %v1790 = vsub.f32 %v1566, %v1734
    %v1791 = vsub.f32 %v1567, %v1743
    %v1792 = vsub.f32 %v1568, %v1752
    %v1793 = vsub.f32 %v1569, %v1761
    %v1794 = vsub.f32 %v1570, %v1770
    %v1795 = vsub.f32 %v1571, %v1779
    %v1796 = vadd.f32 %v1379, %v1780
    %v1797 = vadd.f32 %v1380, %v1781
    %v1798 = vadd.f32 %v1381, %v1782
    %v1799 = vadd.f32 %v1382, %v1783
    %v1800 = vadd.f32 %v1383, %v1784
    %v1801 = vadd.f32 %v1384, %v1785
    %v1802 = vadd.f32 %v1385, %v1786
    %v1803 = vadd.f32 %v1386, %v1787
    %v1804 = vadd.f32 %v1387, %v1788
    %v1805 = vadd.f32 %v1388, %v1789
    %v1806 = vadd.f32 %v1389, %v1790
    %v1807 = vadd.f32 %v1390, %v1791
    %v1808 = vadd.f32 %v1391, %v1792
    %v1809 = vadd.f32 %v1392, %v1793
    %v1810 = vadd.f32 %v1393, %v1794
    %v1811 = vadd.f32 %v1394, %v1795
    %s1812 = scalar_lea.vmem %s2, 256
    %v1813 = vld [vmem:[%s1812] sm:$0xff]
    %v1814 = vld [vmem:[%s1812 + $0x8] sm:$0xff]
    %v1815 = vld [vmem:[%s1812 + $0x10] sm:$0xff]
    %v1816 = vld [vmem:[%s1812 + $0x18] sm:$0xff]
    %v1817 = vld [vmem:[%s1812 + $0x20] sm:$0xff]
    %v1818 = vld [vmem:[%s1812 + $0x28] sm:$0xff]
    %v1819 = vld [vmem:[%s1812 + $0x30] sm:$0xff]
    %v1820 = vld [vmem:[%s1812 + $0x38] sm:$0xff]
    %v1821 = vld [vmem:[%s1812 + $0x40] sm:$0xff]
    %v1822 = vld [vmem:[%s1812 + $0x48] sm:$0xff]
    %v1823 = vld [vmem:[%s1812 + $0x50] sm:$0xff]
    %v1824 = vld [vmem:[%s1812 + $0x58] sm:$0xff]
    %v1825 = vld [vmem:[%s1812 + $0x60] sm:$0xff]
    %v1826 = vld [vmem:[%s1812 + $0x68] sm:$0xff]
    %v1827 = vld [vmem:[%s1812 + $0x70] sm:$0xff]
    %v1828 = vld [vmem:[%s1812 + $0x78] sm:$0xff]
    %1829 = vset.pattern.permute.xlu0 0
    %1830 = vperm.xlu0 %1829, %v1813
    %v1831 = vpop.permute.xlu0 %1830
    %1832 = vset.pattern.permute.xlu0 0
    %1833 = vperm.xlu0 %1832, %v1814
    %v1834 = vpop.permute.xlu0 %1833
    %1835 = vset.pattern.permute.xlu0 0
    %1836 = vperm.xlu0 %1835, %v1815
    %v1837 = vpop.permute.xlu0 %1836
    %1838 = vset.pattern.permute.xlu0 0
    %1839 = vperm.xlu0 %1838, %v1816
    %v1840 = vpop.permute.xlu0 %1839
    %1841 = vset.pattern.permute.xlu0 0
    %1842 = vperm.xlu0 %1841, %v1817
    %v1843 = vpop.permute.xlu0 %1842
    %1844 = vset.pattern.permute.xlu0 0
    %1845 = vperm.xlu0 %1844, %v1818
    %v1846 = vpop.permute.xlu0 %1845
    %1847 = vset.pattern.permute.xlu0 0
    %1848 = vperm.xlu0 %1847, %v1819
    %v1849 = vpop.permute.xlu0 %1848
    %1850 = vset.pattern.permute.xlu0 0
    %1851 = vperm.xlu0 %1850, %v1820
    %v1852 = vpop.permute.xlu0 %1851
    %1853 = vset.pattern.permute.xlu0 0
    %1854 = vperm.xlu0 %1853, %v1821
    %v1855 = vpop.permute.xlu0 %1854
    %1856 = vset.pattern.permute.xlu0 0
    %1857 = vperm.xlu0 %1856, %v1822
    %v1858 = vpop.permute.xlu0 %1857
    %1859 = vset.pattern.permute.xlu0 0
    %1860 = vperm.xlu0 %1859, %v1823
    %v1861 = vpop.permute.xlu0 %1860
    %1862 = vset.pattern.permute.xlu0 0
    %1863 = vperm.xlu0 %1862, %v1824
    %v1864 = vpop.permute.xlu0 %1863
    %1865 = vset.pattern.permute.xlu0 0
    %1866 = vperm.xlu0 %1865, %v1825
    %v1867 = vpop.permute.xlu0 %1866
    %1868 = vset.pattern.permute.xlu0 0
    %1869 = vperm.xlu0 %1868, %v1826
    %v1870 = vpop.permute.xlu0 %1869
    %1871 = vset.pattern.permute.xlu0 0
    %1872 = vperm.xlu0 %1871, %v1827
    %v1873 = vpop.permute.xlu0 %1872
    %1874 = vset.pattern.permute.xlu0 0
    %1875 = vperm.xlu0 %1874, %v1828
    %v1876 = vpop.permute.xlu0 %1875
    %vm1877 = vcmp.eq.s32.totalorder %v1831, %v22
    %vm1878 = vcmp.eq.s32.totalorder %v1834, %v22
    %vm1879 = vcmp.eq.s32.totalorder %v1837, %v22
    %vm1880 = vcmp.eq.s32.totalorder %v1840, %v22
    %vm1881 = vcmp.eq.s32.totalorder %v1843, %v22
    %vm1882 = vcmp.eq.s32.totalorder %v1846, %v22
    %vm1883 = vcmp.eq.s32.totalorder %v1849, %v22
    %vm1884 = vcmp.eq.s32.totalorder %v1852, %v22
    %vm1885 = vcmp.eq.s32.totalorder %v1855, %v22
    %vm1886 = vcmp.eq.s32.totalorder %v1858, %v22
    %vm1887 = vcmp.eq.s32.totalorder %v1861, %v22
    %vm1888 = vcmp.eq.s32.totalorder %v1864, %v22
    %vm1889 = vcmp.eq.s32.totalorder %v1867, %v22
    %vm1890 = vcmp.eq.s32.totalorder %v1870, %v22
    %vm1891 = vcmp.eq.s32.totalorder %v1873, %v22
    %vm1892 = vcmp.eq.s32.totalorder %v1876, %v22
    %v1893 = vsel %vm1877, %v517, 0.0
    %v1894 = vsel %vm1878, %v522, 0.0
    %v1895 = vsel %vm1879, %v527, 0.0
    %v1896 = vsel %vm1880, %v532, 0.0
    %v1897 = vsel %vm1881, %v537, 0.0
    %v1898 = vsel %vm1882, %v542, 0.0
    %v1899 = vsel %vm1883, %v547, 0.0
    %v1900 = vsel %vm1884, %v552, 0.0
    %v1901 = vsel %vm1885, %v557, 0.0
    %v1902 = vsel %vm1886, %v562, 0.0
    %v1903 = vsel %vm1887, %v567, 0.0
    %v1904 = vsel %vm1888, %v572, 0.0
    %v1905 = vsel %vm1889, %v577, 0.0
    %v1906 = vsel %vm1890, %v582, 0.0
    %v1907 = vsel %vm1891, %v587, 0.0
    %v1908 = vsel %vm1892, %v592, 0.0
    %v1909 = vsel %vm151, %v1893, 0.0
    %1910 = vadd.xlane.f32.xlu0 %v1909
    %v1911 = vpop.xlane.xlu0 %1910
    %v1912 = vsel %vm151, %v1894, 0.0
    %1913 = vadd.xlane.f32.xlu0 %v1912
    %v1914 = vpop.xlane.xlu0 %1913
    %v1915 = vsel %vm151, %v1895, 0.0
    %1916 = vadd.xlane.f32.xlu0 %v1915
    %v1917 = vpop.xlane.xlu0 %1916
    %v1918 = vsel %vm151, %v1896, 0.0
    %1919 = vadd.xlane.f32.xlu0 %v1918
    %v1920 = vpop.xlane.xlu0 %1919
    %v1921 = vsel %vm151, %v1897, 0.0
    %1922 = vadd.xlane.f32.xlu0 %v1921
    %v1923 = vpop.xlane.xlu0 %1922
    %v1924 = vsel %vm151, %v1898, 0.0
    %1925 = vadd.xlane.f32.xlu0 %v1924
    %v1926 = vpop.xlane.xlu0 %1925
    %v1927 = vsel %vm151, %v1899, 0.0
    %1928 = vadd.xlane.f32.xlu0 %v1927
    %v1929 = vpop.xlane.xlu0 %1928
    %v1930 = vsel %vm151, %v1900, 0.0
    %1931 = vadd.xlane.f32.xlu0 %v1930
    %v1932 = vpop.xlane.xlu0 %1931
    %v1933 = vsel %vm151, %v1901, 0.0
    %1934 = vadd.xlane.f32.xlu0 %v1933
    %v1935 = vpop.xlane.xlu0 %1934
    %v1936 = vsel %vm151, %v1902, 0.0
    %1937 = vadd.xlane.f32.xlu0 %v1936
    %v1938 = vpop.xlane.xlu0 %1937
    %v1939 = vsel %vm151, %v1903, 0.0
    %1940 = vadd.xlane.f32.xlu0 %v1939
    %v1941 = vpop.xlane.xlu0 %1940
    %v1942 = vsel %vm151, %v1904, 0.0
    %1943 = vadd.xlane.f32.xlu0 %v1942
    %v1944 = vpop.xlane.xlu0 %1943
    %v1945 = vsel %vm151, %v1905, 0.0
    %1946 = vadd.xlane.f32.xlu0 %v1945
    %v1947 = vpop.xlane.xlu0 %1946
    %v1948 = vsel %vm151, %v1906, 0.0
    %1949 = vadd.xlane.f32.xlu0 %v1948
    %v1950 = vpop.xlane.xlu0 %1949
    %v1951 = vsel %vm151, %v1907, 0.0
    %1952 = vadd.xlane.f32.xlu0 %v1951
    %v1953 = vpop.xlane.xlu0 %1952
    %v1954 = vsel %vm151, %v1908, 0.0
    %1955 = vadd.xlane.f32.xlu0 %v1954
    %v1956 = vpop.xlane.xlu0 %1955
    %v1957 = vsub.f32 0.0, %v1911
    %v1958 = vsub.f32 0.0, %v1914
    %v1959 = vsub.f32 0.0, %v1917
    %v1960 = vsub.f32 0.0, %v1920
    %v1961 = vsub.f32 0.0, %v1923
    %v1962 = vsub.f32 0.0, %v1926
    %v1963 = vsub.f32 0.0, %v1929
    %v1964 = vsub.f32 0.0, %v1932
    %v1965 = vsub.f32 0.0, %v1935
    %v1966 = vsub.f32 0.0, %v1938
    %v1967 = vsub.f32 0.0, %v1941
    %v1968 = vsub.f32 0.0, %v1944
    %v1969 = vsub.f32 0.0, %v1947
    %v1970 = vsub.f32 0.0, %v1950
    %v1971 = vsub.f32 0.0, %v1953
    %v1972 = vsub.f32 0.0, %v1956
    %v1973 = vmin.f32 %v1957, 0.0
    %v1974 = vmin.f32 %v1958, 0.0
    %v1975 = vmin.f32 %v1959, 0.0
    %v1976 = vmin.f32 %v1960, 0.0
    %v1977 = vmin.f32 %v1961, 0.0
    %v1978 = vmin.f32 %v1962, 0.0
    %v1979 = vmin.f32 %v1963, 0.0
    %v1980 = vmin.f32 %v1964, 0.0
    %v1981 = vmin.f32 %v1965, 0.0
    %v1982 = vmin.f32 %v1966, 0.0
    %v1983 = vmin.f32 %v1967, 0.0
    %v1984 = vmin.f32 %v1968, 0.0
    %v1985 = vmin.f32 %v1969, 0.0
    %v1986 = vmin.f32 %v1970, 0.0
    %v1987 = vmin.f32 %v1971, 0.0
    %v1988 = vmin.f32 %v1972, 0.0
    %v1989 = vand.u32 2147483647, %v1957
    %v1990 = vand.u32 2147483647, %v1958
    %v1991 = vand.u32 2147483647, %v1959
    %v1992 = vand.u32 2147483647, %v1960
    %v1993 = vand.u32 2147483647, %v1961
    %v1994 = vand.u32 2147483647, %v1962
    %v1995 = vand.u32 2147483647, %v1963
    %v1996 = vand.u32 2147483647, %v1964
    %v1997 = vand.u32 2147483647, %v1965
    %v1998 = vand.u32 2147483647, %v1966
    %v1999 = vand.u32 2147483647, %v1967
    %v2000 = vand.u32 2147483647, %v1968
    %v2001 = vand.u32 2147483647, %v1969
    %v2002 = vand.u32 2147483647, %v1970
    %v2003 = vand.u32 2147483647, %v1971
    %v2004 = vand.u32 2147483647, %v1972
    %v2005 = vsub.f32 0.0, %v1989
    %v2006 = vsub.f32 0.0, %v1990
    %v2007 = vsub.f32 0.0, %v1991
    %v2008 = vsub.f32 0.0, %v1992
    %v2009 = vsub.f32 0.0, %v1993
    %v2010 = vsub.f32 0.0, %v1994
    %v2011 = vsub.f32 0.0, %v1995
    %v2012 = vsub.f32 0.0, %v1996
    %v2013 = vsub.f32 0.0, %v1997
    %v2014 = vsub.f32 0.0, %v1998
    %v2015 = vsub.f32 0.0, %v1999
    %v2016 = vsub.f32 0.0, %v2000
    %v2017 = vsub.f32 0.0, %v2001
    %v2018 = vsub.f32 0.0, %v2002
    %v2019 = vsub.f32 0.0, %v2003
    %v2020 = vsub.f32 0.0, %v2004
    %v2021 = vmul.f32 %v2005, 1.442695
    %v2022 = vpow.pop %v2021
    %v2023 = vmul.f32 %v2006, 1.442695
    %v2024 = vpow.pop %v2023
    %v2025 = vmul.f32 %v2007, 1.442695
    %v2026 = vpow.pop %v2025
    %v2027 = vmul.f32 %v2008, 1.442695
    %v2028 = vpow.pop %v2027
    %v2029 = vmul.f32 %v2009, 1.442695
    %v2030 = vpow.pop %v2029
    %v2031 = vmul.f32 %v2010, 1.442695
    %v2032 = vpow.pop %v2031
    %v2033 = vmul.f32 %v2011, 1.442695
    %v2034 = vpow.pop %v2033
    %v2035 = vmul.f32 %v2012, 1.442695
    %v2036 = vpow.pop %v2035
    %v2037 = vmul.f32 %v2013, 1.442695
    %v2038 = vpow.pop %v2037
    %v2039 = vmul.f32 %v2014, 1.442695
    %v2040 = vpow.pop %v2039
    %v2041 = vmul.f32 %v2015, 1.442695
    %v2042 = vpow.pop %v2041
    %v2043 = vmul.f32 %v2016, 1.442695
    %v2044 = vpow.pop %v2043
    %v2045 = vmul.f32 %v2017, 1.442695
    %v2046 = vpow.pop %v2045
    %v2047 = vmul.f32 %v2018, 1.442695
    %v2048 = vpow.pop %v2047
    %v2049 = vmul.f32 %v2019, 1.442695
    %v2050 = vpow.pop %v2049
    %v2051 = vmul.f32 %v2020, 1.442695
    %v2052 = vpow.pop %v2051
    %v2053 = vadd.f32 %v2022, 1.0
    %v2054 = vlog2.pop %v2053
    %v2055 = vmul.f32 %v2054, 0.6931472
    %v2056 = vmul.f32 -0.5, %v2022
    %v2057 = vadd.f32 %v2056, 1.0
    %v2058 = vmul.f32 %v2057, %v2022
    %v2059 = vand.u32 2147483647, %v2022
    %vm2060 = vcmp.lt.f32.partialorder %v2059, 0.0004427343
    %v2061 = vsel %vm2060, %v2058, %v2055
    %v2062 = vadd.f32 %v2024, 1.0
    %v2063 = vlog2.pop %v2062
    %v2064 = vmul.f32 %v2063, 0.6931472
    %v2065 = vmul.f32 -0.5, %v2024
    %v2066 = vadd.f32 %v2065, 1.0
    %v2067 = vmul.f32 %v2066, %v2024
    %v2068 = vand.u32 2147483647, %v2024
    %vm2069 = vcmp.lt.f32.partialorder %v2068, 0.0004427343
    %v2070 = vsel %vm2069, %v2067, %v2064
    %v2071 = vadd.f32 %v2026, 1.0
    %v2072 = vlog2.pop %v2071
    %v2073 = vmul.f32 %v2072, 0.6931472
    %v2074 = vmul.f32 -0.5, %v2026
    %v2075 = vadd.f32 %v2074, 1.0
    %v2076 = vmul.f32 %v2075, %v2026
    %v2077 = vand.u32 2147483647, %v2026
    %vm2078 = vcmp.lt.f32.partialorder %v2077, 0.0004427343
    %v2079 = vsel %vm2078, %v2076, %v2073
    %v2080 = vadd.f32 %v2028, 1.0
    %v2081 = vlog2.pop %v2080
    %v2082 = vmul.f32 %v2081, 0.6931472
    %v2083 = vmul.f32 -0.5, %v2028
    %v2084 = vadd.f32 %v2083, 1.0
    %v2085 = vmul.f32 %v2084, %v2028
    %v2086 = vand.u32 2147483647, %v2028
    %vm2087 = vcmp.lt.f32.partialorder %v2086, 0.0004427343
    %v2088 = vsel %vm2087, %v2085, %v2082
    %v2089 = vadd.f32 %v2030, 1.0
    %v2090 = vlog2.pop %v2089
    %v2091 = vmul.f32 %v2090, 0.6931472
    %v2092 = vmul.f32 -0.5, %v2030
    %v2093 = vadd.f32 %v2092, 1.0
    %v2094 = vmul.f32 %v2093, %v2030
    %v2095 = vand.u32 2147483647, %v2030
    %vm2096 = vcmp.lt.f32.partialorder %v2095, 0.0004427343
    %v2097 = vsel %vm2096, %v2094, %v2091
    %v2098 = vadd.f32 %v2032, 1.0
    %v2099 = vlog2.pop %v2098
    %v2100 = vmul.f32 %v2099, 0.6931472
    %v2101 = vmul.f32 -0.5, %v2032
    %v2102 = vadd.f32 %v2101, 1.0
    %v2103 = vmul.f32 %v2102, %v2032
    %v2104 = vand.u32 2147483647, %v2032
    %vm2105 = vcmp.lt.f32.partialorder %v2104, 0.0004427343
    %v2106 = vsel %vm2105, %v2103, %v2100
    %v2107 = vadd.f32 %v2034, 1.0
    %v2108 = vlog2.pop %v2107
    %v2109 = vmul.f32 %v2108, 0.6931472
    %v2110 = vmul.f32 -0.5, %v2034
    %v2111 = vadd.f32 %v2110, 1.0
    %v2112 = vmul.f32 %v2111, %v2034
    %v2113 = vand.u32 2147483647, %v2034
    %vm2114 = vcmp.lt.f32.partialorder %v2113, 0.0004427343
    %v2115 = vsel %vm2114, %v2112, %v2109
    %v2116 = vadd.f32 %v2036, 1.0
    %v2117 = vlog2.pop %v2116
    %v2118 = vmul.f32 %v2117, 0.6931472
    %v2119 = vmul.f32 -0.5, %v2036
    %v2120 = vadd.f32 %v2119, 1.0
    %v2121 = vmul.f32 %v2120, %v2036
    %v2122 = vand.u32 2147483647, %v2036
    %vm2123 = vcmp.lt.f32.partialorder %v2122, 0.0004427343
    %v2124 = vsel %vm2123, %v2121, %v2118
    %v2125 = vadd.f32 %v2038, 1.0
    %v2126 = vlog2.pop %v2125
    %v2127 = vmul.f32 %v2126, 0.6931472
    %v2128 = vmul.f32 -0.5, %v2038
    %v2129 = vadd.f32 %v2128, 1.0
    %v2130 = vmul.f32 %v2129, %v2038
    %v2131 = vand.u32 2147483647, %v2038
    %vm2132 = vcmp.lt.f32.partialorder %v2131, 0.0004427343
    %v2133 = vsel %vm2132, %v2130, %v2127
    %v2134 = vadd.f32 %v2040, 1.0
    %v2135 = vlog2.pop %v2134
    %v2136 = vmul.f32 %v2135, 0.6931472
    %v2137 = vmul.f32 -0.5, %v2040
    %v2138 = vadd.f32 %v2137, 1.0
    %v2139 = vmul.f32 %v2138, %v2040
    %v2140 = vand.u32 2147483647, %v2040
    %vm2141 = vcmp.lt.f32.partialorder %v2140, 0.0004427343
    %v2142 = vsel %vm2141, %v2139, %v2136
    %v2143 = vadd.f32 %v2042, 1.0
    %v2144 = vlog2.pop %v2143
    %v2145 = vmul.f32 %v2144, 0.6931472
    %v2146 = vmul.f32 -0.5, %v2042
    %v2147 = vadd.f32 %v2146, 1.0
    %v2148 = vmul.f32 %v2147, %v2042
    %v2149 = vand.u32 2147483647, %v2042
    %vm2150 = vcmp.lt.f32.partialorder %v2149, 0.0004427343
    %v2151 = vsel %vm2150, %v2148, %v2145
    %v2152 = vadd.f32 %v2044, 1.0
    %v2153 = vlog2.pop %v2152
    %v2154 = vmul.f32 %v2153, 0.6931472
    %v2155 = vmul.f32 -0.5, %v2044
    %v2156 = vadd.f32 %v2155, 1.0
    %v2157 = vmul.f32 %v2156, %v2044
    %v2158 = vand.u32 2147483647, %v2044
    %vm2159 = vcmp.lt.f32.partialorder %v2158, 0.0004427343
    %v2160 = vsel %vm2159, %v2157, %v2154
    %v2161 = vadd.f32 %v2046, 1.0
    %v2162 = vlog2.pop %v2161
    %v2163 = vmul.f32 %v2162, 0.6931472
    %v2164 = vmul.f32 -0.5, %v2046
    %v2165 = vadd.f32 %v2164, 1.0
    %v2166 = vmul.f32 %v2165, %v2046
    %v2167 = vand.u32 2147483647, %v2046
    %vm2168 = vcmp.lt.f32.partialorder %v2167, 0.0004427343
    %v2169 = vsel %vm2168, %v2166, %v2163
    %v2170 = vadd.f32 %v2048, 1.0
    %v2171 = vlog2.pop %v2170
    %v2172 = vmul.f32 %v2171, 0.6931472
    %v2173 = vmul.f32 -0.5, %v2048
    %v2174 = vadd.f32 %v2173, 1.0
    %v2175 = vmul.f32 %v2174, %v2048
    %v2176 = vand.u32 2147483647, %v2048
    %vm2177 = vcmp.lt.f32.partialorder %v2176, 0.0004427343
    %v2178 = vsel %vm2177, %v2175, %v2172
    %v2179 = vadd.f32 %v2050, 1.0
    %v2180 = vlog2.pop %v2179
    %v2181 = vmul.f32 %v2180, 0.6931472
    %v2182 = vmul.f32 -0.5, %v2050
    %v2183 = vadd.f32 %v2182, 1.0
    %v2184 = vmul.f32 %v2183, %v2050
    %v2185 = vand.u32 2147483647, %v2050
    %vm2186 = vcmp.lt.f32.partialorder %v2185, 0.0004427343
    %v2187 = vsel %vm2186, %v2184, %v2181
    %v2188 = vadd.f32 %v2052, 1.0
    %v2189 = vlog2.pop %v2188
    %v2190 = vmul.f32 %v2189, 0.6931472
    %v2191 = vmul.f32 -0.5, %v2052
    %v2192 = vadd.f32 %v2191, 1.0
    %v2193 = vmul.f32 %v2192, %v2052
    %v2194 = vand.u32 2147483647, %v2052
    %vm2195 = vcmp.lt.f32.partialorder %v2194, 0.0004427343
    %v2196 = vsel %vm2195, %v2193, %v2190
    %v2197 = vsub.f32 %v1973, %v2061
    %v2198 = vsub.f32 %v1974, %v2070
    %v2199 = vsub.f32 %v1975, %v2079
    %v2200 = vsub.f32 %v1976, %v2088
    %v2201 = vsub.f32 %v1977, %v2097
    %v2202 = vsub.f32 %v1978, %v2106
    %v2203 = vsub.f32 %v1979, %v2115
    %v2204 = vsub.f32 %v1980, %v2124
    %v2205 = vsub.f32 %v1981, %v2133
    %v2206 = vsub.f32 %v1982, %v2142
    %v2207 = vsub.f32 %v1983, %v2151
    %v2208 = vsub.f32 %v1984, %v2160
    %v2209 = vsub.f32 %v1985, %v2169
    %v2210 = vsub.f32 %v1986, %v2178
    %v2211 = vsub.f32 %v1987, %v2187
    %v2212 = vsub.f32 %v1988, %v2196
    %v2213 = vadd.f32 %v1796, %v2197
    %v2214 = vadd.f32 %v1797, %v2198
    %v2215 = vadd.f32 %v1798, %v2199
    %v2216 = vadd.f32 %v1799, %v2200
    %v2217 = vadd.f32 %v1800, %v2201
    %v2218 = vadd.f32 %v1801, %v2202
    %v2219 = vadd.f32 %v1802, %v2203
    %v2220 = vadd.f32 %v1803, %v2204
    %v2221 = vadd.f32 %v1804, %v2205
    %v2222 = vadd.f32 %v1805, %v2206
    %v2223 = vadd.f32 %v1806, %v2207
    %v2224 = vadd.f32 %v1807, %v2208
    %v2225 = vadd.f32 %v1808, %v2209
    %v2226 = vadd.f32 %v1809, %v2210
    %v2227 = vadd.f32 %v1810, %v2211
    %v2228 = vadd.f32 %v1811, %v2212
    %s2229 = scalar_lea.vmem %s2, 384
    %v2230 = vld [vmem:[%s2229] sm:$0xff]
    %v2231 = vld [vmem:[%s2229 + $0x8] sm:$0xff]
    %v2232 = vld [vmem:[%s2229 + $0x10] sm:$0xff]
    %v2233 = vld [vmem:[%s2229 + $0x18] sm:$0xff]
    %v2234 = vld [vmem:[%s2229 + $0x20] sm:$0xff]
    %v2235 = vld [vmem:[%s2229 + $0x28] sm:$0xff]
    %v2236 = vld [vmem:[%s2229 + $0x30] sm:$0xff]
    %v2237 = vld [vmem:[%s2229 + $0x38] sm:$0xff]
    %v2238 = vld [vmem:[%s2229 + $0x40] sm:$0xff]
    %v2239 = vld [vmem:[%s2229 + $0x48] sm:$0xff]
    %v2240 = vld [vmem:[%s2229 + $0x50] sm:$0xff]
    %v2241 = vld [vmem:[%s2229 + $0x58] sm:$0xff]
    %v2242 = vld [vmem:[%s2229 + $0x60] sm:$0xff]
    %v2243 = vld [vmem:[%s2229 + $0x68] sm:$0xff]
    %v2244 = vld [vmem:[%s2229 + $0x70] sm:$0xff]
    %v2245 = vld [vmem:[%s2229 + $0x78] sm:$0xff]
    %2246 = vset.pattern.permute.xlu0 0
    %2247 = vperm.xlu0 %2246, %v2230
    %v2248 = vpop.permute.xlu0 %2247
    %2249 = vset.pattern.permute.xlu0 0
    %2250 = vperm.xlu0 %2249, %v2231
    %v2251 = vpop.permute.xlu0 %2250
    %2252 = vset.pattern.permute.xlu0 0
    %2253 = vperm.xlu0 %2252, %v2232
    %v2254 = vpop.permute.xlu0 %2253
    %2255 = vset.pattern.permute.xlu0 0
    %2256 = vperm.xlu0 %2255, %v2233
    %v2257 = vpop.permute.xlu0 %2256
    %2258 = vset.pattern.permute.xlu0 0
    %2259 = vperm.xlu0 %2258, %v2234
    %v2260 = vpop.permute.xlu0 %2259
    %2261 = vset.pattern.permute.xlu0 0
    %2262 = vperm.xlu0 %2261, %v2235
    %v2263 = vpop.permute.xlu0 %2262
    %2264 = vset.pattern.permute.xlu0 0
    %2265 = vperm.xlu0 %2264, %v2236
    %v2266 = vpop.permute.xlu0 %2265
    %2267 = vset.pattern.permute.xlu0 0
    %2268 = vperm.xlu0 %2267, %v2237
    %v2269 = vpop.permute.xlu0 %2268
    %2270 = vset.pattern.permute.xlu0 0
    %2271 = vperm.xlu0 %2270, %v2238
    %v2272 = vpop.permute.xlu0 %2271
    %2273 = vset.pattern.permute.xlu0 0
    %2274 = vperm.xlu0 %2273, %v2239
    %v2275 = vpop.permute.xlu0 %2274
    %2276 = vset.pattern.permute.xlu0 0
    %2277 = vperm.xlu0 %2276, %v2240
    %v2278 = vpop.permute.xlu0 %2277
    %2279 = vset.pattern.permute.xlu0 0
    %2280 = vperm.xlu0 %2279, %v2241
    %v2281 = vpop.permute.xlu0 %2280
    %2282 = vset.pattern.permute.xlu0 0
    %2283 = vperm.xlu0 %2282, %v2242
    %v2284 = vpop.permute.xlu0 %2283
    %2285 = vset.pattern.permute.xlu0 0
    %2286 = vperm.xlu0 %2285, %v2243
    %v2287 = vpop.permute.xlu0 %2286
    %2288 = vset.pattern.permute.xlu0 0
    %2289 = vperm.xlu0 %2288, %v2244
    %v2290 = vpop.permute.xlu0 %2289
    %2291 = vset.pattern.permute.xlu0 0
    %2292 = vperm.xlu0 %2291, %v2245
    %v2293 = vpop.permute.xlu0 %2292
    %vm2294 = vcmp.eq.s32.totalorder %v2248, %v22
    %vm2295 = vcmp.eq.s32.totalorder %v2251, %v22
    %vm2296 = vcmp.eq.s32.totalorder %v2254, %v22
    %vm2297 = vcmp.eq.s32.totalorder %v2257, %v22
    %vm2298 = vcmp.eq.s32.totalorder %v2260, %v22
    %vm2299 = vcmp.eq.s32.totalorder %v2263, %v22
    %vm2300 = vcmp.eq.s32.totalorder %v2266, %v22
    %vm2301 = vcmp.eq.s32.totalorder %v2269, %v22
    %vm2302 = vcmp.eq.s32.totalorder %v2272, %v22
    %vm2303 = vcmp.eq.s32.totalorder %v2275, %v22
    %vm2304 = vcmp.eq.s32.totalorder %v2278, %v22
    %vm2305 = vcmp.eq.s32.totalorder %v2281, %v22
    %vm2306 = vcmp.eq.s32.totalorder %v2284, %v22
    %vm2307 = vcmp.eq.s32.totalorder %v2287, %v22
    %vm2308 = vcmp.eq.s32.totalorder %v2290, %v22
    %vm2309 = vcmp.eq.s32.totalorder %v2293, %v22
    %v2310 = vsel %vm2294, %v517, 0.0
    %v2311 = vsel %vm2295, %v522, 0.0
    %v2312 = vsel %vm2296, %v527, 0.0
    %v2313 = vsel %vm2297, %v532, 0.0
    %v2314 = vsel %vm2298, %v537, 0.0
    %v2315 = vsel %vm2299, %v542, 0.0
    %v2316 = vsel %vm2300, %v547, 0.0
    %v2317 = vsel %vm2301, %v552, 0.0
    %v2318 = vsel %vm2302, %v557, 0.0
    %v2319 = vsel %vm2303, %v562, 0.0
    %v2320 = vsel %vm2304, %v567, 0.0
    %v2321 = vsel %vm2305, %v572, 0.0
    %v2322 = vsel %vm2306, %v577, 0.0
    %v2323 = vsel %vm2307, %v582, 0.0
    %v2324 = vsel %vm2308, %v587, 0.0
    %v2325 = vsel %vm2309, %v592, 0.0
    %v2326 = vsel %vm151, %v2310, 0.0
    %2327 = vadd.xlane.f32.xlu0 %v2326
    %v2328 = vpop.xlane.xlu0 %2327
    %v2329 = vsel %vm151, %v2311, 0.0
    %2330 = vadd.xlane.f32.xlu0 %v2329
    %v2331 = vpop.xlane.xlu0 %2330
    %v2332 = vsel %vm151, %v2312, 0.0
    %2333 = vadd.xlane.f32.xlu0 %v2332
    %v2334 = vpop.xlane.xlu0 %2333
    %v2335 = vsel %vm151, %v2313, 0.0
    %2336 = vadd.xlane.f32.xlu0 %v2335
    %v2337 = vpop.xlane.xlu0 %2336
    %v2338 = vsel %vm151, %v2314, 0.0
    %2339 = vadd.xlane.f32.xlu0 %v2338
    %v2340 = vpop.xlane.xlu0 %2339
    %v2341 = vsel %vm151, %v2315, 0.0
    %2342 = vadd.xlane.f32.xlu0 %v2341
    %v2343 = vpop.xlane.xlu0 %2342
    %v2344 = vsel %vm151, %v2316, 0.0
    %2345 = vadd.xlane.f32.xlu0 %v2344
    %v2346 = vpop.xlane.xlu0 %2345
    %v2347 = vsel %vm151, %v2317, 0.0
    %2348 = vadd.xlane.f32.xlu0 %v2347
    %v2349 = vpop.xlane.xlu0 %2348
    %v2350 = vsel %vm151, %v2318, 0.0
    %2351 = vadd.xlane.f32.xlu0 %v2350
    %v2352 = vpop.xlane.xlu0 %2351
    %v2353 = vsel %vm151, %v2319, 0.0
    %2354 = vadd.xlane.f32.xlu0 %v2353
    %v2355 = vpop.xlane.xlu0 %2354
    %v2356 = vsel %vm151, %v2320, 0.0
    %2357 = vadd.xlane.f32.xlu0 %v2356
    %v2358 = vpop.xlane.xlu0 %2357
    %v2359 = vsel %vm151, %v2321, 0.0
    %2360 = vadd.xlane.f32.xlu0 %v2359
    %v2361 = vpop.xlane.xlu0 %2360
    %v2362 = vsel %vm151, %v2322, 0.0
    %2363 = vadd.xlane.f32.xlu0 %v2362
    %v2364 = vpop.xlane.xlu0 %2363
    %v2365 = vsel %vm151, %v2323, 0.0
    %2366 = vadd.xlane.f32.xlu0 %v2365
    %v2367 = vpop.xlane.xlu0 %2366
    %v2368 = vsel %vm151, %v2324, 0.0
    %2369 = vadd.xlane.f32.xlu0 %v2368
    %v2370 = vpop.xlane.xlu0 %2369
    %v2371 = vsel %vm151, %v2325, 0.0
    %2372 = vadd.xlane.f32.xlu0 %v2371
    %v2373 = vpop.xlane.xlu0 %2372
    %v2374 = vsub.f32 0.0, %v2328
    %v2375 = vsub.f32 0.0, %v2331
    %v2376 = vsub.f32 0.0, %v2334
    %v2377 = vsub.f32 0.0, %v2337
    %v2378 = vsub.f32 0.0, %v2340
    %v2379 = vsub.f32 0.0, %v2343
    %v2380 = vsub.f32 0.0, %v2346
    %v2381 = vsub.f32 0.0, %v2349
    %v2382 = vsub.f32 0.0, %v2352
    %v2383 = vsub.f32 0.0, %v2355
    %v2384 = vsub.f32 0.0, %v2358
    %v2385 = vsub.f32 0.0, %v2361
    %v2386 = vsub.f32 0.0, %v2364
    %v2387 = vsub.f32 0.0, %v2367
    %v2388 = vsub.f32 0.0, %v2370
    %v2389 = vsub.f32 0.0, %v2373
    %v2390 = vmin.f32 %v2374, 0.0
    %v2391 = vmin.f32 %v2375, 0.0
    %v2392 = vmin.f32 %v2376, 0.0
    %v2393 = vmin.f32 %v2377, 0.0
    %v2394 = vmin.f32 %v2378, 0.0
    %v2395 = vmin.f32 %v2379, 0.0
    %v2396 = vmin.f32 %v2380, 0.0
    %v2397 = vmin.f32 %v2381, 0.0
    %v2398 = vmin.f32 %v2382, 0.0
    %v2399 = vmin.f32 %v2383, 0.0
    %v2400 = vmin.f32 %v2384, 0.0
    %v2401 = vmin.f32 %v2385, 0.0
    %v2402 = vmin.f32 %v2386, 0.0
    %v2403 = vmin.f32 %v2387, 0.0
    %v2404 = vmin.f32 %v2388, 0.0
    %v2405 = vmin.f32 %v2389, 0.0
    %v2406 = vand.u32 2147483647, %v2374
    %v2407 = vand.u32 2147483647, %v2375
    %v2408 = vand.u32 2147483647, %v2376
    %v2409 = vand.u32 2147483647, %v2377
    %v2410 = vand.u32 2147483647, %v2378
    %v2411 = vand.u32 2147483647, %v2379
    %v2412 = vand.u32 2147483647, %v2380
    %v2413 = vand.u32 2147483647, %v2381
    %v2414 = vand.u32 2147483647, %v2382
    %v2415 = vand.u32 2147483647, %v2383
    %v2416 = vand.u32 2147483647, %v2384
    %v2417 = vand.u32 2147483647, %v2385
    %v2418 = vand.u32 2147483647, %v2386
    %v2419 = vand.u32 2147483647, %v2387
    %v2420 = vand.u32 2147483647, %v2388
    %v2421 = vand.u32 2147483647, %v2389
    %v2422 = vsub.f32 0.0, %v2406
    %v2423 = vsub.f32 0.0, %v2407
    %v2424 = vsub.f32 0.0, %v2408
    %v2425 = vsub.f32 0.0, %v2409
    %v2426 = vsub.f32 0.0, %v2410
    %v2427 = vsub.f32 0.0, %v2411
    %v2428 = vsub.f32 0.0, %v2412
    %v2429 = vsub.f32 0.0, %v2413
    %v2430 = vsub.f32 0.0, %v2414
    %v2431 = vsub.f32 0.0, %v2415
    %v2432 = vsub.f32 0.0, %v2416
    %v2433 = vsub.f32 0.0, %v2417
    %v2434 = vsub.f32 0.0, %v2418
    %v2435 = vsub.f32 0.0, %v2419
    %v2436 = vsub.f32 0.0, %v2420
    %v2437 = vsub.f32 0.0, %v2421
    %v2438 = vmul.f32 %v2422, 1.442695
    %v2439 = vpow.pop %v2438
    %v2440 = vmul.f32 %v2423, 1.442695
    %v2441 = vpow.pop %v2440
    %v2442 = vmul.f32 %v2424, 1.442695
    %v2443 = vpow.pop %v2442
    %v2444 = vmul.f32 %v2425, 1.442695
    %v2445 = vpow.pop %v2444
    %v2446 = vmul.f32 %v2426, 1.442695
    %v2447 = vpow.pop %v2446
    %v2448 = vmul.f32 %v2427, 1.442695
    %v2449 = vpow.pop %v2448
    %v2450 = vmul.f32 %v2428, 1.442695
    %v2451 = vpow.pop %v2450
    %v2452 = vmul.f32 %v2429, 1.442695
    %v2453 = vpow.pop %v2452
    %v2454 = vmul.f32 %v2430, 1.442695
    %v2455 = vpow.pop %v2454
    %v2456 = vmul.f32 %v2431, 1.442695
    %v2457 = vpow.pop %v2456
    %v2458 = vmul.f32 %v2432, 1.442695
    %v2459 = vpow.pop %v2458
    %v2460 = vmul.f32 %v2433, 1.442695
    %v2461 = vpow.pop %v2460
    %v2462 = vmul.f32 %v2434, 1.442695
    %v2463 = vpow.pop %v2462
    %v2464 = vmul.f32 %v2435, 1.442695
    %v2465 = vpow.pop %v2464
    %v2466 = vmul.f32 %v2436, 1.442695
    %v2467 = vpow.pop %v2466
    %v2468 = vmul.f32 %v2437, 1.442695
    %v2469 = vpow.pop %v2468
    %v2470 = vadd.f32 %v2439, 1.0
    %v2471 = vlog2.pop %v2470
    %v2472 = vmul.f32 %v2471, 0.6931472
    %v2473 = vmul.f32 -0.5, %v2439
    %v2474 = vadd.f32 %v2473, 1.0
    %v2475 = vmul.f32 %v2474, %v2439
    %v2476 = vand.u32 2147483647, %v2439
    %vm2477 = vcmp.lt.f32.partialorder %v2476, 0.0004427343
    %v2478 = vsel %vm2477, %v2475, %v2472
    %v2479 = vadd.f32 %v2441, 1.0
    %v2480 = vlog2.pop %v2479
    %v2481 = vmul.f32 %v2480, 0.6931472
    %v2482 = vmul.f32 -0.5, %v2441
    %v2483 = vadd.f32 %v2482, 1.0
    %v2484 = vmul.f32 %v2483, %v2441
    %v2485 = vand.u32 2147483647, %v2441
    %vm2486 = vcmp.lt.f32.partialorder %v2485, 0.0004427343
    %v2487 = vsel %vm2486, %v2484, %v2481
    %v2488 = vadd.f32 %v2443, 1.0
    %v2489 = vlog2.pop %v2488
    %v2490 = vmul.f32 %v2489, 0.6931472
    %v2491 = vmul.f32 -0.5, %v2443
    %v2492 = vadd.f32 %v2491, 1.0
    %v2493 = vmul.f32 %v2492, %v2443
    %v2494 = vand.u32 2147483647, %v2443
    %vm2495 = vcmp.lt.f32.partialorder %v2494, 0.0004427343
    %v2496 = vsel %vm2495, %v2493, %v2490
    %v2497 = vadd.f32 %v2445, 1.0
    %v2498 = vlog2.pop %v2497
    %v2499 = vmul.f32 %v2498, 0.6931472
    %v2500 = vmul.f32 -0.5, %v2445
    %v2501 = vadd.f32 %v2500, 1.0
    %v2502 = vmul.f32 %v2501, %v2445
    %v2503 = vand.u32 2147483647, %v2445
    %vm2504 = vcmp.lt.f32.partialorder %v2503, 0.0004427343
    %v2505 = vsel %vm2504, %v2502, %v2499
    %v2506 = vadd.f32 %v2447, 1.0
    %v2507 = vlog2.pop %v2506
    %v2508 = vmul.f32 %v2507, 0.6931472
    %v2509 = vmul.f32 -0.5, %v2447
    %v2510 = vadd.f32 %v2509, 1.0
    %v2511 = vmul.f32 %v2510, %v2447
    %v2512 = vand.u32 2147483647, %v2447
    %vm2513 = vcmp.lt.f32.partialorder %v2512, 0.0004427343
    %v2514 = vsel %vm2513, %v2511, %v2508
    %v2515 = vadd.f32 %v2449, 1.0
    %v2516 = vlog2.pop %v2515
    %v2517 = vmul.f32 %v2516, 0.6931472
    %v2518 = vmul.f32 -0.5, %v2449
    %v2519 = vadd.f32 %v2518, 1.0
    %v2520 = vmul.f32 %v2519, %v2449
    %v2521 = vand.u32 2147483647, %v2449
    %vm2522 = vcmp.lt.f32.partialorder %v2521, 0.0004427343
    %v2523 = vsel %vm2522, %v2520, %v2517
    %v2524 = vadd.f32 %v2451, 1.0
    %v2525 = vlog2.pop %v2524
    %v2526 = vmul.f32 %v2525, 0.6931472
    %v2527 = vmul.f32 -0.5, %v2451
    %v2528 = vadd.f32 %v2527, 1.0
    %v2529 = vmul.f32 %v2528, %v2451
    %v2530 = vand.u32 2147483647, %v2451
    %vm2531 = vcmp.lt.f32.partialorder %v2530, 0.0004427343
    %v2532 = vsel %vm2531, %v2529, %v2526
    %v2533 = vadd.f32 %v2453, 1.0
    %v2534 = vlog2.pop %v2533
    %v2535 = vmul.f32 %v2534, 0.6931472
    %v2536 = vmul.f32 -0.5, %v2453
    %v2537 = vadd.f32 %v2536, 1.0
    %v2538 = vmul.f32 %v2537, %v2453
    %v2539 = vand.u32 2147483647, %v2453
    %vm2540 = vcmp.lt.f32.partialorder %v2539, 0.0004427343
    %v2541 = vsel %vm2540, %v2538, %v2535
    %v2542 = vadd.f32 %v2455, 1.0
    %v2543 = vlog2.pop %v2542
    %v2544 = vmul.f32 %v2543, 0.6931472
    %v2545 = vmul.f32 -0.5, %v2455
    %v2546 = vadd.f32 %v2545, 1.0
    %v2547 = vmul.f32 %v2546, %v2455
    %v2548 = vand.u32 2147483647, %v2455
    %vm2549 = vcmp.lt.f32.partialorder %v2548, 0.0004427343
    %v2550 = vsel %vm2549, %v2547, %v2544
    %v2551 = vadd.f32 %v2457, 1.0
    %v2552 = vlog2.pop %v2551
    %v2553 = vmul.f32 %v2552, 0.6931472
    %v2554 = vmul.f32 -0.5, %v2457
    %v2555 = vadd.f32 %v2554, 1.0
    %v2556 = vmul.f32 %v2555, %v2457
    %v2557 = vand.u32 2147483647, %v2457
    %vm2558 = vcmp.lt.f32.partialorder %v2557, 0.0004427343
    %v2559 = vsel %vm2558, %v2556, %v2553
    %v2560 = vadd.f32 %v2459, 1.0
    %v2561 = vlog2.pop %v2560
    %v2562 = vmul.f32 %v2561, 0.6931472
    %v2563 = vmul.f32 -0.5, %v2459
    %v2564 = vadd.f32 %v2563, 1.0
    %v2565 = vmul.f32 %v2564, %v2459
    %v2566 = vand.u32 2147483647, %v2459
    %vm2567 = vcmp.lt.f32.partialorder %v2566, 0.0004427343
    %v2568 = vsel %vm2567, %v2565, %v2562
    %v2569 = vadd.f32 %v2461, 1.0
    %v2570 = vlog2.pop %v2569
    %v2571 = vmul.f32 %v2570, 0.6931472
    %v2572 = vmul.f32 -0.5, %v2461
    %v2573 = vadd.f32 %v2572, 1.0
    %v2574 = vmul.f32 %v2573, %v2461
    %v2575 = vand.u32 2147483647, %v2461
    %vm2576 = vcmp.lt.f32.partialorder %v2575, 0.0004427343
    %v2577 = vsel %vm2576, %v2574, %v2571
    %v2578 = vadd.f32 %v2463, 1.0
    %v2579 = vlog2.pop %v2578
    %v2580 = vmul.f32 %v2579, 0.6931472
    %v2581 = vmul.f32 -0.5, %v2463
    %v2582 = vadd.f32 %v2581, 1.0
    %v2583 = vmul.f32 %v2582, %v2463
    %v2584 = vand.u32 2147483647, %v2463
    %vm2585 = vcmp.lt.f32.partialorder %v2584, 0.0004427343
    %v2586 = vsel %vm2585, %v2583, %v2580
    %v2587 = vadd.f32 %v2465, 1.0
    %v2588 = vlog2.pop %v2587
    %v2589 = vmul.f32 %v2588, 0.6931472
    %v2590 = vmul.f32 -0.5, %v2465
    %v2591 = vadd.f32 %v2590, 1.0
    %v2592 = vmul.f32 %v2591, %v2465
    %v2593 = vand.u32 2147483647, %v2465
    %vm2594 = vcmp.lt.f32.partialorder %v2593, 0.0004427343
    %v2595 = vsel %vm2594, %v2592, %v2589
    %v2596 = vadd.f32 %v2467, 1.0
    %v2597 = vlog2.pop %v2596
    %v2598 = vmul.f32 %v2597, 0.6931472
    %v2599 = vmul.f32 -0.5, %v2467
    %v2600 = vadd.f32 %v2599, 1.0
    %v2601 = vmul.f32 %v2600, %v2467
    %v2602 = vand.u32 2147483647, %v2467
    %vm2603 = vcmp.lt.f32.partialorder %v2602, 0.0004427343
    %v2604 = vsel %vm2603, %v2601, %v2598
    %v2605 = vadd.f32 %v2469, 1.0
    %v2606 = vlog2.pop %v2605
    %v2607 = vmul.f32 %v2606, 0.6931472
    %v2608 = vmul.f32 -0.5, %v2469
    %v2609 = vadd.f32 %v2608, 1.0
    %v2610 = vmul.f32 %v2609, %v2469
    %v2611 = vand.u32 2147483647, %v2469
    %vm2612 = vcmp.lt.f32.partialorder %v2611, 0.0004427343
    %v2613 = vsel %vm2612, %v2610, %v2607
    %v2614 = vsub.f32 %v2390, %v2478
    %v2615 = vsub.f32 %v2391, %v2487
    %v2616 = vsub.f32 %v2392, %v2496
    %v2617 = vsub.f32 %v2393, %v2505
    %v2618 = vsub.f32 %v2394, %v2514
    %v2619 = vsub.f32 %v2395, %v2523
    %v2620 = vsub.f32 %v2396, %v2532
    %v2621 = vsub.f32 %v2397, %v2541
    %v2622 = vsub.f32 %v2398, %v2550
    %v2623 = vsub.f32 %v2399, %v2559
    %v2624 = vsub.f32 %v2400, %v2568
    %v2625 = vsub.f32 %v2401, %v2577
    %v2626 = vsub.f32 %v2402, %v2586
    %v2627 = vsub.f32 %v2403, %v2595
    %v2628 = vsub.f32 %v2404, %v2604
    %v2629 = vsub.f32 %v2405, %v2613
    %v2630 = vadd.f32 %v2213, %v2614
    %v2631 = vadd.f32 %v2214, %v2615
    %v2632 = vadd.f32 %v2215, %v2616
    %v2633 = vadd.f32 %v2216, %v2617
    %v2634 = vadd.f32 %v2217, %v2618
    %v2635 = vadd.f32 %v2218, %v2619
    %v2636 = vadd.f32 %v2219, %v2620
    %v2637 = vadd.f32 %v2220, %v2621
    %v2638 = vadd.f32 %v2221, %v2622
    %v2639 = vadd.f32 %v2222, %v2623
    %v2640 = vadd.f32 %v2223, %v2624
    %v2641 = vadd.f32 %v2224, %v2625
    %v2642 = vadd.f32 %v2225, %v2626
    %v2643 = vadd.f32 %v2226, %v2627
    %v2644 = vadd.f32 %v2227, %v2628
    %v2645 = vadd.f32 %v2228, %v2629
    %v2646 = vadd.f32 %v963, %v2630
    %v2647 = vadd.f32 %v964, %v2631
    %v2648 = vadd.f32 %v965, %v2632
    %v2649 = vadd.f32 %v966, %v2633
    %v2650 = vadd.f32 %v967, %v2634
    %v2651 = vadd.f32 %v968, %v2635
    %v2652 = vadd.f32 %v969, %v2636
    %v2653 = vadd.f32 %v970, %v2637
    %v2654 = vadd.f32 %v971, %v2638
    %v2655 = vadd.f32 %v972, %v2639
    %v2656 = vadd.f32 %v973, %v2640
    %v2657 = vadd.f32 %v974, %v2641
    %v2658 = vadd.f32 %v975, %v2642
    %v2659 = vadd.f32 %v976, %v2643
    %v2660 = vadd.f32 %v977, %v2644
    %v2661 = vadd.f32 %v978, %v2645
    %s2662 = smul.u32 0, 128
    %v2663 = vstv %s2662
    %v2664 = vadd.s32 %v22, %v2663
    %vm2665 = vcmp.lt.s32.totalorder %v2664, 8
    %v2682 = vlaneseq
    %v2683 = vshrl.u32 %v2682, 7
    %v2684 = vsub.s32 %v22, %v2683
    %v2685 = vrot.slane %v2646, %v2684
    %v2686 = vadd.s32 %v22, 4294967288
    %v2687 = vlaneseq
    %v2688 = vshrl.u32 %v2687, 7
    %v2689 = vsub.s32 %v2686, %v2688
    %v2690 = vrot.slane %v2647, %v2689
    %vm2691 = vcmask 130112
    %v2692 = vsel %vm2691, %v2690, %v2685
    %v2693 = vadd.s32 %v22, 4294967280
    %v2694 = vlaneseq
    %v2695 = vshrl.u32 %v2694, 7
    %v2696 = vsub.s32 %v2693, %v2695
    %v2697 = vrot.slane %v2648, %v2696
    %vm2698 = vcmask 195712
    %v2699 = vsel %vm2698, %v2697, %v2692
    %v2700 = vadd.s32 %v22, 4294967272
    %v2701 = vlaneseq
    %v2702 = vshrl.u32 %v2701, 7
    %v2703 = vsub.s32 %v2700, %v2702
    %v2704 = vrot.slane %v2649, %v2703
    %vm2705 = vcmask 261312
    %v2706 = vsel %vm2705, %v2704, %v2699
    %v2707 = vadd.s32 %v22, 4294967264
    %v2708 = vlaneseq
    %v2709 = vshrl.u32 %v2708, 7
    %v2710 = vsub.s32 %v2707, %v2709
    %v2711 = vrot.slane %v2650, %v2710
    %vm2712 = vcmask 326912
    %v2713 = vsel %vm2712, %v2711, %v2706
    %v2714 = vadd.s32 %v22, 4294967256
    %v2715 = vlaneseq
    %v2716 = vshrl.u32 %v2715, 7
    %v2717 = vsub.s32 %v2714, %v2716
    %v2718 = vrot.slane %v2651, %v2717
    %vm2719 = vcmask 392512
    %v2720 = vsel %vm2719, %v2718, %v2713
    %v2721 = vadd.s32 %v22, 4294967248
    %v2722 = vlaneseq
    %v2723 = vshrl.u32 %v2722, 7
    %v2724 = vsub.s32 %v2721, %v2723
    %v2725 = vrot.slane %v2652, %v2724
    %vm2726 = vcmask 458112
    %v2727 = vsel %vm2726, %v2725, %v2720
    %v2728 = vadd.s32 %v22, 4294967240
    %v2729 = vlaneseq
    %v2730 = vshrl.u32 %v2729, 7
    %v2731 = vsub.s32 %v2728, %v2730
    %v2732 = vrot.slane %v2653, %v2731
    %vm2733 = vcmask 523712
    %v2734 = vsel %vm2733, %v2732, %v2727
    %v2735 = vadd.s32 %v22, 4294967232
    %v2736 = vlaneseq
    %v2737 = vshrl.u32 %v2736, 7
    %v2738 = vsub.s32 %v2735, %v2737
    %v2739 = vrot.slane %v2654, %v2738
    %vm2740 = vcmask 589312
    %v2741 = vsel %vm2740, %v2739, %v2734
    %v2742 = vadd.s32 %v22, 4294967224
    %v2743 = vlaneseq
    %v2744 = vshrl.u32 %v2743, 7
    %v2745 = vsub.s32 %v2742, %v2744
    %v2746 = vrot.slane %v2655, %v2745
    %vm2747 = vcmask 654912
    %v2748 = vsel %vm2747, %v2746, %v2741
    %v2749 = vadd.s32 %v22, 4294967216
    %v2750 = vlaneseq
    %v2751 = vshrl.u32 %v2750, 7
    %v2752 = vsub.s32 %v2749, %v2751
    %v2753 = vrot.slane %v2656, %v2752
    %vm2754 = vcmask 720512
    %v2755 = vsel %vm2754, %v2753, %v2748
    %v2756 = vadd.s32 %v22, 4294967208
    %v2757 = vlaneseq
    %v2758 = vshrl.u32 %v2757, 7
    %v2759 = vsub.s32 %v2756, %v2758
    %v2760 = vrot.slane %v2657, %v2759
    %vm2761 = vcmask 786112
    %v2762 = vsel %vm2761, %v2760, %v2755
    %v2763 = vadd.s32 %v22, 4294967200
    %v2764 = vlaneseq
    %v2765 = vshrl.u32 %v2764, 7
    %v2766 = vsub.s32 %v2763, %v2765
    %v2767 = vrot.slane %v2658, %v2766
    %vm2768 = vcmask 851712
    %v2769 = vsel %vm2768, %v2767, %v2762
    %v2770 = vadd.s32 %v22, 4294967192
    %v2771 = vlaneseq
    %v2772 = vshrl.u32 %v2771, 7
    %v2773 = vsub.s32 %v2770, %v2772
    %v2774 = vrot.slane %v2659, %v2773
    %vm2775 = vcmask 917312
    %v2776 = vsel %vm2775, %v2774, %v2769
    %v2777 = vadd.s32 %v22, 4294967184
    %v2778 = vlaneseq
    %v2779 = vshrl.u32 %v2778, 7
    %v2780 = vsub.s32 %v2777, %v2779
    %v2781 = vrot.slane %v2660, %v2780
    %vm2782 = vcmask 982912
    %v2783 = vsel %vm2782, %v2781, %v2776
    %v2784 = vadd.s32 %v22, 4294967176
    %v2785 = vlaneseq
    %v2786 = vshrl.u32 %v2785, 7
    %v2787 = vsub.s32 %v2784, %v2786
    %v2788 = vrot.slane %v2661, %v2787
    %vm2789 = vcmask 1048512
    %v2790 = vsel %vm2789, %v2788, %v2783
    %v2792 = vsel %vm2665, %v2790, 0.0
    %2793 = vst [vmem:[#allocation2] sm:$0x1] %v2792
    // Predicated region
    $region22: #{tpu_custom_call.1} parent=1 // pred_check
      _
    $region23: #{tpu_custom_call.1} parent=1 // pred_check_branch
      %2795 = sbr.rel (0) target = $region25
    $region24: #{tpu_custom_call.1} parent=1 // pred_region
      %s2797 = ssub.s32 16, 16
      %2798 = vsyncadd [#allocation3], %s2797
      %s2800 = sshll.u32 [#allocation2], 4
      %s2801 = int_to_ptr.vmem [resolvable:$true] %s2800
      %2803 = dma.vmem_to_hbm [thread:$0]  %s2801, 16, %s5, [#allocation3]
    $region25: #{tpu_custom_call.1} parent=1 // pred_fallthru
      _
    // Predicated region
    $region26: #{tpu_custom_call.1} parent=1 // pred_check
      _
    $region27: #{tpu_custom_call.1} parent=1 // pred_check_branch
      %2805 = sbr.rel (0) target = $region29
    $region28: #{tpu_custom_call.1} parent=1 // pred_region
      %2806 = dma.done [#allocation3], 16
    $region29: #{tpu_custom_call.1} parent=1 // pred_fallthru
      _
    %2807 = vsyncpa [#allocation3], 1

</llo_original>
